<compile_context>
chip_gen: v7x
topology: tpu7x:2x2x1
jax: 0.10.0
libtpu: 0.0.40
codegen_flags: <defaults>
</compile_context>

<pallas_src>
import functools

import jax
import jax.numpy as jnp
import numpy as np
from jax.experimental import pallas as pl
from jax.experimental.pallas import tpu as pltpu


def _sa_kernel(x_ref, ws_ref, wtbv_ref, bt_ref, g_ref, b_ref,
               out_ref, t_scratch, *, batch, channels):
    """Whole SA_Layer forward for the full (small) batch in one invocation."""
    C = channels
    Cq = C // 4
    N = x_ref.shape[-1]

    ws = ws_ref[...]            # (Cq + 2C, C)  stacked [wqk; wt@wv; wt]
    wtbv = wtbv_ref[...]        # (C, 1)        wt @ bv
    bt = bt_ref[...]            # (C, 1)

    # Lane-concatenate the batch: (C, B*N).  B=2 -> (32, 256): two vreg copies,
    # lets the stacked conv run as a single 256-lane-wide MXU matmul.
    x_all = jnp.concatenate([x_ref[b] for b in range(batch)], axis=-1)

    # One stacked conv matmul: (Cq+2C, C) @ (C, B*N).
    conv_all = jnp.dot(ws, x_all, preferred_element_type=jnp.float32)

    # Per-channel BN statistic accumulators (fused into the batch loop).
    sum_acc = jnp.zeros((C, 1), jnp.float32)
    sq_acc = jnp.zeros((C, 1), jnp.float32)

    for b in range(batch):      # static unrolled loop over small batch
        lo = b * N
        qk = conv_all[:Cq, lo:lo + N]            # (Cq, N)  shared q/k conv
        u = conv_all[Cq:Cq + C, lo:lo + N]       # (C, N)   (wt@wv) @ xb
        tx = conv_all[Cq + C:, lo:lo + N]        # (C, N)   wt @ xb

        # energy = x_q @ x_k = qk^T @ qk  -> (N, N)
        energy = jax.lax.dot_general(
            qk, qk, (((0,), (0,)), ((), ())),
            preferred_element_type=jnp.float32)

        # softmax over last dim (reciprocal-multiply instead of divide)
        e = energy - jnp.max(energy, axis=-1, keepdims=True)
        p = jnp.exp(e)
        inv_row = pl.reciprocal(jnp.sum(p, axis=-1, keepdims=True))
        attn = p * inv_row
        # torch: attention / (1e-9 + attention.sum(dim=1, keepdims=True))
        # dim=1 of (B, N, N) == row axis of the per-batch (N, N) matrix.
        colsum = jnp.sum(attn, axis=0, keepdims=True)            # (1, N)
        inv_col = pl.reciprocal(1e-9 + colsum)
        attn = attn * inv_col
        colsum_n = colsum * inv_col      # column sums of the renormalized attn

        # Folded value/trans path:
        #   t = wt@xb + bt - ( (wt@wv@xb)@attn + (wt@bv) * colsum(attn) )
        u_attn = jnp.dot(u, attn, preferred_element_type=jnp.float32)  # (C, N)
        t = tx + bt - (u_attn + wtbv * colsum_n)
        t_scratch[b] = t

        sum_acc = sum_acc + jnp.sum(t, axis=-1, keepdims=True)
        sq_acc = sq_acc + jnp.sum(t * t, axis=-1, keepdims=True)

    # BatchNorm1d (training-mode batch statistics) over (B, N) per channel,
    # via E[x^2] - E[x]^2 accumulated above.
    count = float(batch * N)
    mean = sum_acc * (1.0 / count)                           # (C, 1)
    var = sq_acc * (1.0 / count) - mean * mean               # (C, 1)

    gamma = g_ref[...]                                       # (C, 1)
    beta = b_ref[...]                                        # (C, 1)
    scale = gamma * jax.lax.rsqrt(var + 1e-5)                # (C, 1)
    shift = beta - mean * scale                              # (C, 1)

    # x + ReLU(BN(t))
    tn = t_scratch[...] * scale[None] + shift[None]          # (B, C, N)
    out_ref[...] = x_ref[...] + jnp.maximum(tn, 0.0)


def sa_layer(x, wqk, wv, bv, wt, bt, gamma, beta):
    B, C, N = x.shape
    # Host-side algebraic folding and weight stacking.
    wtv = wt @ wv                                            # (C, C)
    wtbv = wt @ bv                                           # (C, 1)
    w_stacked = jnp.concatenate([wqk, wtv, wt], axis=0)      # (C//4 + 2C, C)

    vmem = pl.BlockSpec(memory_space=pltpu.MemorySpace.VMEM)
    return pl.pallas_call(
        functools.partial(_sa_kernel, batch=B, channels=C),
        out_shape=jax.ShapeDtypeStruct((B, C, N), jnp.float32),
        in_specs=[vmem] * 6,
        out_specs=vmem,
        scratch_shapes=[pltpu.VMEM((B, C, N), jnp.float32)],
    )(x, w_stacked, wtbv, bt, gamma, beta)


def sa_layer_ref(x, wqk, wv, bv, wt, bt, gamma, beta):
    """Pure-JAX reference mirroring the PyTorch forward."""
    qk = jnp.einsum('dc,bcn->bdn', wqk, x)                   # (B, C//4, N)
    x_q = jnp.transpose(qk, (0, 2, 1))                       # (B, N, C//4)
    x_k = qk
    x_v = jnp.einsum('dc,bcn->bdn', wv, x) + bv[None]        # (B, C, N)
    energy = x_q @ x_k                                       # (B, N, N)
    attn = jax.nn.softmax(energy, axis=-1)
    attn = attn / (1e-9 + attn.sum(axis=1, keepdims=True))
    x_r = x_v @ attn
    t = jnp.einsum('dc,bcn->bdn', wt, x - x_r) + bt[None]
    mean = t.mean(axis=(0, 2), keepdims=True)
    var = ((t - mean) ** 2).mean(axis=(0, 2), keepdims=True)
    tn = (t - mean) / jnp.sqrt(var + 1e-5) * gamma[None] + beta[None]
    return x + jax.nn.relu(tn)


if __name__ == "__main__":
    B, C, N = 2, 32, 128        # channels=32 -> q/k dim = 8, points = 128
    key = jax.random.PRNGKey(0)
    kx, kqk, kv, kbv, kt, kbt = jax.random.split(key, 6)

    x = jax.random.normal(kx, (B, C, N), dtype=jnp.float32)

    # Deterministic synthetic parameters (shapes from __init__); q/k share weight.
    wqk = jax.random.normal(kqk, (C // 4, C), dtype=jnp.float32) * 0.1
    wv = jax.random.normal(kv, (C, C), dtype=jnp.float32) * 0.1
    bv = jax.random.normal(kbv, (C, 1), dtype=jnp.float32) * 0.1
    wt = jax.random.normal(kt, (C, C), dtype=jnp.float32) * 0.1
    bt = jax.random.normal(kbt, (C, 1), dtype=jnp.float32) * 0.1
    gamma = jnp.ones((C, 1), dtype=jnp.float32)              # BN weight init
    beta = jnp.zeros((C, 1), dtype=jnp.float32)              # BN bias init

    out = jax.block_until_ready(
        sa_layer(x, wqk, wv, bv, wt, bt, gamma, beta))

    ref = jax.block_until_ready(
        sa_layer_ref(x, wqk, wv, bv, wt, bt, gamma, beta))

    np.testing.assert_allclose(np.asarray(out), np.asarray(ref),
                               rtol=1e-4, atol=1e-4)
    print("KERNEL_OK")
</pallas_src>

<mosaic_0001>
module attributes {stable_mosaic.version = 11 : i64} {
  func.func @_sa_kernel(%arg0: memref<2x32x128xf32, #tpu.memory_space<vmem>>, %arg1: memref<72x32xf32, #tpu.memory_space<vmem>>, %arg2: memref<32x1xf32, #tpu.memory_space<vmem>>, %arg3: memref<32x1xf32, #tpu.memory_space<vmem>>, %arg4: memref<32x1xf32, #tpu.memory_space<vmem>>, %arg5: memref<32x1xf32, #tpu.memory_space<vmem>>, %arg6: memref<2x32x128xf32, #tpu.memory_space<vmem>>, %arg7: memref<2x32x128xf32, #tpu.memory_space<vmem>>) attributes {dimension_semantics = [], scalar_prefetch = 0 : i64, scratch_operands = 1 : i64, tpu.core_type = #tpu.core_type<tc>} {
    %c0 = arith.constant 0 : index
    %c0_0 = arith.constant 0 : index
    %0 = vector.load %arg1[%c0, %c0_0] : memref<72x32xf32, #tpu.memory_space<vmem>>, vector<72x32xf32>
    %c0_1 = arith.constant 0 : index
    %c0_2 = arith.constant 0 : index
    %1 = vector.load %arg2[%c0_1, %c0_2] : memref<32x1xf32, #tpu.memory_space<vmem>>, vector<32x1xf32>
    %c0_3 = arith.constant 0 : index
    %c0_4 = arith.constant 0 : index
    %2 = vector.load %arg3[%c0_3, %c0_4] : memref<32x1xf32, #tpu.memory_space<vmem>>, vector<32x1xf32>
    %c0_5 = arith.constant 0 : index
    %c0_6 = arith.constant 0 : index
    %c0_7 = arith.constant 0 : index
    %3 = vector.load %arg0[%c0_5, %c0_6, %c0_7] : memref<2x32x128xf32, #tpu.memory_space<vmem>>, vector<1x32x128xf32>
    %4 = vector.shape_cast %3 : vector<1x32x128xf32> to vector<32x128xf32>
    %c1 = arith.constant 1 : index
    %c0_8 = arith.constant 0 : index
    %c0_9 = arith.constant 0 : index
    %5 = vector.load %arg0[%c1, %c0_8, %c0_9] : memref<2x32x128xf32, #tpu.memory_space<vmem>>, vector<1x32x128xf32>
    %6 = vector.shape_cast %5 : vector<1x32x128xf32> to vector<32x128xf32>
    %7 = tpu.concatenate %4, %6 in 1 : vector<32x128xf32>, vector<32x128xf32> -> vector<32x256xf32>
    %cst = arith.constant dense<0.000000e+00> : vector<72x256xf32>
    %8 = tpu.matmul %0, %7, %cst {dimension_numbers = #tpu.dot_dimension_numbers<[1], [0], [0], [1], [0, 0, 1, 1], [], []>} : vector<72x32xf32>, vector<32x256xf32>, vector<72x256xf32> -> vector<72x256xf32>
    %cst_10 = arith.constant 0.000000e+00 : f32
    %9 = vector.broadcast %cst_10 : f32 to vector<32x1xf32>
    %cst_11 = arith.constant 0.000000e+00 : f32
    %10 = vector.broadcast %cst_11 : f32 to vector<32x1xf32>
    %11 = vector.extract_strided_slice %8 {offsets = [0, 0], sizes = [8, 128], strides = [1, 1]} : vector<72x256xf32> to vector<8x128xf32>
    %12 = vector.extract_strided_slice %8 {offsets = [8, 0], sizes = [32, 128], strides = [1, 1]} : vector<72x256xf32> to vector<32x128xf32>
    %13 = vector.extract_strided_slice %8 {offsets = [40, 0], sizes = [32, 128], strides = [1, 1]} : vector<72x256xf32> to vector<32x128xf32>
    %cst_12 = arith.constant dense<0.000000e+00> : vector<128x128xf32>
    %14 = tpu.matmul %11, %11, %cst_12 {dimension_numbers = #tpu.dot_dimension_numbers<[0], [0], [1], [1], [0, 1, 1, 1], [], []>} : vector<8x128xf32>, vector<8x128xf32>, vector<128x128xf32> -> vector<128x128xf32>
    %cst_13 = arith.constant dense<0xFF800000> : vector<128xf32>
    %15 = vector.multi_reduction <maximumf>, %14, %cst_13 [1] : vector<128x128xf32> to vector<128xf32>
    %16 = vector.shape_cast %15 : vector<128xf32> to vector<128x1xf32>
    %17 = vector.broadcast %16 : vector<128x1xf32> to vector<128x128xf32>
    %18 = arith.subf %14, %17 : vector<128x128xf32>
    %19 = math.exp %18 : vector<128x128xf32>
    %cst_14 = arith.constant dense<0.000000e+00> : vector<128xf32>
    %20 = vector.multi_reduction <add>, %19, %cst_14 [1] : vector<128x128xf32> to vector<128xf32>
    %21 = vector.shape_cast %20 : vector<128xf32> to vector<128x1xf32>
    %22 = tpu.reciprocal %21 : vector<128x1xf32> -> vector<128x1xf32>
    %23 = vector.broadcast %22 : vector<128x1xf32> to vector<128x128xf32>
    %24 = arith.mulf %19, %23 : vector<128x128xf32>
    %cst_15 = arith.constant dense<0.000000e+00> : vector<128xf32>
    %25 = vector.multi_reduction <add>, %24, %cst_15 [0] : vector<128x128xf32> to vector<128xf32>
    %26 = vector.shape_cast %25 : vector<128xf32> to vector<1x128xf32>
    %cst_16 = arith.constant 9.99999971E-10 : f32
    %27 = vector.broadcast %cst_16 : f32 to vector<1x128xf32>
    %28 = arith.addf %27, %26 : vector<1x128xf32>
    %29 = tpu.reciprocal %28 : vector<1x128xf32> -> vector<1x128xf32>
    %30 = vector.broadcast %29 : vector<1x128xf32> to vector<128x128xf32>
    %31 = arith.mulf %24, %30 : vector<128x128xf32>
    %32 = arith.mulf %26, %29 : vector<1x128xf32>
    %cst_17 = arith.constant dense<0.000000e+00> : vector<32x128xf32>
    %33 = tpu.matmul %12, %31, %cst_17 {dimension_numbers = #tpu.dot_dimension_numbers<[1], [0], [0], [1], [0, 0, 1, 1], [], []>} : vector<32x128xf32>, vector<128x128xf32>, vector<32x128xf32> -> vector<32x128xf32>
    %34 = vector.broadcast %2 : vector<32x1xf32> to vector<32x128xf32>
    %35 = arith.addf %13, %34 : vector<32x128xf32>
    %36 = vector.broadcast %1 : vector<32x1xf32> to vector<32x128xf32>
    %37 = vector.broadcast %32 : vector<1x128xf32> to vector<32x128xf32>
    %38 = arith.mulf %36, %37 : vector<32x128xf32>
    %39 = arith.addf %33, %38 : vector<32x128xf32>
    %40 = arith.subf %35, %39 : vector<32x128xf32>
    %c0_18 = arith.constant 0 : index
    %c0_19 = arith.constant 0 : index
    %c0_20 = arith.constant 0 : index
    %41 = vector.load %arg7[%c0_18, %c0_19, %c0_20] : memref<2x32x128xf32, #tpu.memory_space<vmem>>, vector<1x32x128xf32>
    %42 = vector.shape_cast %41 : vector<1x32x128xf32> to vector<32x128xf32>
    %43 = vector.shape_cast %40 : vector<32x128xf32> to vector<1x32x128xf32>
    tpu.vector_store %arg7[%c0_18, %c0_19, %c0_20], %43 {strides = array<i32>} : memref<2x32x128xf32, #tpu.memory_space<vmem>>, vector<1x32x128xf32>,
    %cst_21 = arith.constant dense<0.000000e+00> : vector<32xf32>
    %44 = vector.multi_reduction <add>, %40, %cst_21 [1] : vector<32x128xf32> to vector<32xf32>
    %45 = vector.shape_cast %44 : vector<32xf32> to vector<32x1xf32>
    %46 = arith.addf %9, %45 : vector<32x1xf32>
    %47 = arith.mulf %40, %40 : vector<32x128xf32>
    %cst_22 = arith.constant dense<0.000000e+00> : vector<32xf32>
    %48 = vector.multi_reduction <add>, %47, %cst_22 [1] : vector<32x128xf32> to vector<32xf32>
    %49 = vector.shape_cast %48 : vector<32xf32> to vector<32x1xf32>
    %50 = arith.addf %10, %49 : vector<32x1xf32>
    %51 = vector.extract_strided_slice %8 {offsets = [0, 128], sizes = [8, 128], strides = [1, 1]} : vector<72x256xf32> to vector<8x128xf32>
    %52 = vector.extract_strided_slice %8 {offsets = [8, 128], sizes = [32, 128], strides = [1, 1]} : vector<72x256xf32> to vector<32x128xf32>
    %53 = vector.extract_strided_slice %8 {offsets = [40, 128], sizes = [32, 128], strides = [1, 1]} : vector<72x256xf32> to vector<32x128xf32>
    %cst_23 = arith.constant dense<0.000000e+00> : vector<128x128xf32>
    %54 = tpu.matmul %51, %51, %cst_23 {dimension_numbers = #tpu.dot_dimension_numbers<[0], [0], [1], [1], [0, 1, 1, 1], [], []>} : vector<8x128xf32>, vector<8x128xf32>, vector<128x128xf32> -> vector<128x128xf32>
    %cst_24 = arith.constant dense<0xFF800000> : vector<128xf32>
    %55 = vector.multi_reduction <maximumf>, %54, %cst_24 [1] : vector<128x128xf32> to vector<128xf32>
    %56 = vector.shape_cast %55 : vector<128xf32> to vector<128x1xf32>
    %57 = vector.broadcast %56 : vector<128x1xf32> to vector<128x128xf32>
    %58 = arith.subf %54, %57 : vector<128x128xf32>
    %59 = math.exp %58 : vector<128x128xf32>
    %cst_25 = arith.constant dense<0.000000e+00> : vector<128xf32>
    %60 = vector.multi_reduction <add>, %59, %cst_25 [1] : vector<128x128xf32> to vector<128xf32>
    %61 = vector.shape_cast %60 : vector<128xf32> to vector<128x1xf32>
    %62 = tpu.reciprocal %61 : vector<128x1xf32> -> vector<128x1xf32>
    %63 = vector.broadcast %62 : vector<128x1xf32> to vector<128x128xf32>
    %64 = arith.mulf %59, %63 : vector<128x128xf32>
    %cst_26 = arith.constant dense<0.000000e+00> : vector<128xf32>
    %65 = vector.multi_reduction <add>, %64, %cst_26 [0] : vector<128x128xf32> to vector<128xf32>
    %66 = vector.shape_cast %65 : vector<128xf32> to vector<1x128xf32>
    %cst_27 = arith.constant 9.99999971E-10 : f32
    %67 = vector.broadcast %cst_27 : f32 to vector<1x128xf32>
    %68 = arith.addf %67, %66 : vector<1x128xf32>
    %69 = tpu.reciprocal %68 : vector<1x128xf32> -> vector<1x128xf32>
    %70 = vector.broadcast %69 : vector<1x128xf32> to vector<128x128xf32>
    %71 = arith.mulf %64, %70 : vector<128x128xf32>
    %72 = arith.mulf %66, %69 : vector<1x128xf32>
    %cst_28 = arith.constant dense<0.000000e+00> : vector<32x128xf32>
    %73 = tpu.matmul %52, %71, %cst_28 {dimension_numbers = #tpu.dot_dimension_numbers<[1], [0], [0], [1], [0, 0, 1, 1], [], []>} : vector<32x128xf32>, vector<128x128xf32>, vector<32x128xf32> -> vector<32x128xf32>
    %74 = vector.broadcast %2 : vector<32x1xf32> to vector<32x128xf32>
    %75 = arith.addf %53, %74 : vector<32x128xf32>
    %76 = vector.broadcast %1 : vector<32x1xf32> to vector<32x128xf32>
    %77 = vector.broadcast %72 : vector<1x128xf32> to vector<32x128xf32>
    %78 = arith.mulf %76, %77 : vector<32x128xf32>
    %79 = arith.addf %73, %78 : vector<32x128xf32>
    %80 = arith.subf %75, %79 : vector<32x128xf32>
    %c1_29 = arith.constant 1 : index
    %c0_30 = arith.constant 0 : index
    %c0_31 = arith.constant 0 : index
    %81 = vector.load %arg7[%c1_29, %c0_30, %c0_31] : memref<2x32x128xf32, #tpu.memory_space<vmem>>, vector<1x32x128xf32>
    %82 = vector.shape_cast %81 : vector<1x32x128xf32> to vector<32x128xf32>
    %83 = vector.shape_cast %80 : vector<32x128xf32> to vector<1x32x128xf32>
    tpu.vector_store %arg7[%c1_29, %c0_30, %c0_31], %83 {strides = array<i32>} : memref<2x32x128xf32, #tpu.memory_space<vmem>>, vector<1x32x128xf32>,
    %cst_32 = arith.constant dense<0.000000e+00> : vector<32xf32>
    %84 = vector.multi_reduction <add>, %80, %cst_32 [1] : vector<32x128xf32> to vector<32xf32>
    %85 = vector.shape_cast %84 : vector<32xf32> to vector<32x1xf32>
    %86 = arith.addf %46, %85 : vector<32x1xf32>
    %87 = arith.mulf %80, %80 : vector<32x128xf32>
    %cst_33 = arith.constant dense<0.000000e+00> : vector<32xf32>
    %88 = vector.multi_reduction <add>, %87, %cst_33 [1] : vector<32x128xf32> to vector<32xf32>
    %89 = vector.shape_cast %88 : vector<32xf32> to vector<32x1xf32>
    %90 = arith.addf %50, %89 : vector<32x1xf32>
    %cst_34 = arith.constant 3.906250e-03 : f32
    %91 = vector.broadcast %cst_34 : f32 to vector<32x1xf32>
    %92 = arith.mulf %86, %91 : vector<32x1xf32>
    %cst_35 = arith.constant 3.906250e-03 : f32
    %93 = vector.broadcast %cst_35 : f32 to vector<32x1xf32>
    %94 = arith.mulf %90, %93 : vector<32x1xf32>
    %95 = arith.mulf %92, %92 : vector<32x1xf32>
    %96 = arith.subf %94, %95 : vector<32x1xf32>
    %c0_36 = arith.constant 0 : index
    %c0_37 = arith.constant 0 : index
    %97 = vector.load %arg4[%c0_36, %c0_37] : memref<32x1xf32, #tpu.memory_space<vmem>>, vector<32x1xf32>
    %c0_38 = arith.constant 0 : index
    %c0_39 = arith.constant 0 : index
    %98 = vector.load %arg5[%c0_38, %c0_39] : memref<32x1xf32, #tpu.memory_space<vmem>>, vector<32x1xf32>
    %cst_40 = arith.constant 9.99999974E-6 : f32
    %99 = vector.broadcast %cst_40 : f32 to vector<32x1xf32>
    %100 = arith.addf %96, %99 : vector<32x1xf32>
    %101 = math.rsqrt %100 : vector<32x1xf32>
    %102 = arith.mulf %97, %101 : vector<32x1xf32>
    %103 = arith.mulf %92, %102 : vector<32x1xf32>
    %104 = arith.subf %98, %103 : vector<32x1xf32>
    %c0_41 = arith.constant 0 : index
    %c0_42 = arith.constant 0 : index
    %c0_43 = arith.constant 0 : index
    %105 = vector.load %arg7[%c0_41, %c0_42, %c0_43] : memref<2x32x128xf32, #tpu.memory_space<vmem>>, vector<2x32x128xf32>
    %106 = vector.shape_cast %102 : vector<32x1xf32> to vector<1x32x1xf32>
    %107 = vector.broadcast %106 : vector<1x32x1xf32> to vector<2x32x128xf32>
    %108 = arith.mulf %105, %107 : vector<2x32x128xf32>
    %109 = vector.shape_cast %104 : vector<32x1xf32> to vector<1x32x1xf32>
    %110 = vector.broadcast %109 : vector<1x32x1xf32> to vector<2x32x128xf32>
    %111 = arith.addf %108, %110 : vector<2x32x128xf32>
    %c0_44 = arith.constant 0 : index
    %c0_45 = arith.constant 0 : index
    %c0_46 = arith.constant 0 : index
    %112 = vector.load %arg0[%c0_44, %c0_45, %c0_46] : memref<2x32x128xf32, #tpu.memory_space<vmem>>, vector<2x32x128xf32>
    %cst_47 = arith.constant 0.000000e+00 : f32
    %113 = vector.broadcast %cst_47 : f32 to vector<2x32x128xf32>
    %114 = arith.maximumf %111, %113 : vector<2x32x128xf32>
    %115 = arith.addf %112, %114 : vector<2x32x128xf32>
    %c0_48 = arith.constant 0 : index
    %c0_49 = arith.constant 0 : index
    %c0_50 = arith.constant 0 : index
    %116 = vector.load %arg6[%c0_48, %c0_49, %c0_50] : memref<2x32x128xf32, #tpu.memory_space<vmem>>, vector<2x32x128xf32>
    tpu.vector_store %arg6[%c0_48, %c0_49, %c0_50], %115 {strides = array<i32>} : memref<2x32x128xf32, #tpu.memory_space<vmem>>, vector<2x32x128xf32>,
    return
  }
}

</mosaic_0001>

<llo_original>
// kernel: tpu_custom_call.1
$region0: #{tpu_custom_call.1}
  #allocation0 [shape = 'u32[]', space=smem, size = 0x4, offset = 0x4, fixed_abs, tag = 'smem constant byte address 0x4 - core index']
  #allocation1 [shape = 'u32[144,128]{1,0:T(1,128)}', space=vmem, size = 0x12000, scoped, tag = 'internal scratch']
  #allocation2 [shape = 'f32[2,32,128]{2,1,0:T(8,128)}', space=vmem, size = 0x8000, scoped, tag = 'scratch operand']
  %s0 = inlined_call_operand.vmem [shape: f32[2,32,128], index: 0, kind: input, shape index: {}]
  %s1 = inlined_call_operand.vmem [shape: f32[72,32], index: 1, kind: input, shape index: {}]
  %s2 = inlined_call_operand.vmem [shape: f32[32,1], index: 2, kind: input, shape index: {}]
  %s3 = inlined_call_operand.vmem [shape: f32[32,1], index: 3, kind: input, shape index: {}]
  %s4 = inlined_call_operand.vmem [shape: f32[32,1], index: 4, kind: input, shape index: {}]
  %s5 = inlined_call_operand.vmem [shape: f32[32,1], index: 5, kind: input, shape index: {}]
  %s6 = inlined_call_operand.hbm [shape: f32[2,32,128], index: 6, kind: output, shape index: {}]
  %s7 = sld [smem:[#allocation0]]
  $region34: #{tpu_custom_call.1} parent=0
    _
  %s9 = ssub.s32 1, %s7
  %s10 = scalar_select 0, %s9, %s7
  $region1: #{tpu_custom_call.1} parent=0
    #allocation3 [shape = 'u8[32768]{0}', space=vmem, size = 0x8000, scoped, tag = 'output window, operand 0, single buffered']
    #allocation4 [shape = 's32[1]{0}', space=sflag, size = 0x4, scoped, tag = 'scoped memory for tpu_custom_call.1']
    %11 = vsyncpa [#allocation4], 0
    // Predicated region
    $region2: #{tpu_custom_call.1} parent=1 // pred_check
      _
    $region3: #{tpu_custom_call.1} parent=1 // pred_check_branch
      %13 = sbr.rel (0) target = $region5
    $region4: #{tpu_custom_call.1} parent=1 // pred_region
      _
    $region5: #{tpu_custom_call.1} parent=1 // pred_fallthru
      _
    // Predicated region
    $region6: #{tpu_custom_call.1} parent=1 // pred_check
      _
    $region7: #{tpu_custom_call.1} parent=1 // pred_check_branch
      %15 = sbr.rel (0) target = $region9
    $region8: #{tpu_custom_call.1} parent=1 // pred_region
      _
    $region9: #{tpu_custom_call.1} parent=1 // pred_fallthru
      _
    // Predicated region
    $region10: #{tpu_custom_call.1} parent=1 // pred_check
      _
    $region11: #{tpu_custom_call.1} parent=1 // pred_check_branch
      %17 = sbr.rel (0) target = $region13
    $region12: #{tpu_custom_call.1} parent=1 // pred_region
      _
    $region13: #{tpu_custom_call.1} parent=1 // pred_fallthru
      _
    // Predicated region
    $region14: #{tpu_custom_call.1} parent=1 // pred_check
      _
    $region15: #{tpu_custom_call.1} parent=1 // pred_check_branch
      %19 = sbr.rel (0) target = $region17
    $region16: #{tpu_custom_call.1} parent=1 // pred_region
      _
    $region17: #{tpu_custom_call.1} parent=1 // pred_fallthru
      _
    // Predicated region
    $region18: #{tpu_custom_call.1} parent=1 // pred_check
      _
    $region19: #{tpu_custom_call.1} parent=1 // pred_check_branch
      %21 = sbr.rel (0) target = $region21
    $region20: #{tpu_custom_call.1} parent=1 // pred_region
      _
    $region21: #{tpu_custom_call.1} parent=1 // pred_fallthru
      _
    // Predicated region
    $region22: #{tpu_custom_call.1} parent=1 // pred_check
      _
    $region23: #{tpu_custom_call.1} parent=1 // pred_check_branch
      %23 = sbr.rel (0) target = $region25
    $region24: #{tpu_custom_call.1} parent=1 // pred_region
      _
    $region25: #{tpu_custom_call.1} parent=1 // pred_fallthru
      _
    %v24 = vld [vmem:[%s1] sm:$0xff]
    %v25 = vld [vmem:[%s1 + $0x8] sm:$0xff]
    %v26 = vld [vmem:[%s1 + $0x10] sm:$0xff]
    %v27 = vld [vmem:[%s1 + $0x18] sm:$0xff]
    %v28 = vld [vmem:[%s1 + $0x20] sm:$0xff]
    %v29 = vld [vmem:[%s1 + $0x28] sm:$0xff]
    %v30 = vld [vmem:[%s1 + $0x30] sm:$0xff]
    %v31 = vld [vmem:[%s1 + $0x38] sm:$0xff]
    %v32 = vld [vmem:[%s1 + $0x40] sm:$0xff]
    %v33 = vld [vmem:[%s2] sm:$0xff]
    %v34 = vld [vmem:[%s2 + $0x8] sm:$0xff]
    %v35 = vld [vmem:[%s2 + $0x10] sm:$0xff]
    %v36 = vld [vmem:[%s2 + $0x18] sm:$0xff]
    %v37 = vld [vmem:[%s3] sm:$0xff]
    %v38 = vld [vmem:[%s3 + $0x8] sm:$0xff]
    %v39 = vld [vmem:[%s3 + $0x10] sm:$0xff]
    %v40 = vld [vmem:[%s3 + $0x18] sm:$0xff]
    %v41 = vld [vmem:[%s0] sm:$0xff]
    %v42 = vld [vmem:[%s0 + $0x8] sm:$0xff]
    %v43 = vld [vmem:[%s0 + $0x10] sm:$0xff]
    %v44 = vld [vmem:[%s0 + $0x18] sm:$0xff]
    %s45 = scalar_lea.vmem %s0, 32
    %v46 = vld [vmem:[%s45] sm:$0xff]
    %v47 = vld [vmem:[%s45 + $0x8] sm:$0xff]
    %v48 = vld [vmem:[%s45 + $0x10] sm:$0xff]
    %v49 = vld [vmem:[%s45 + $0x18] sm:$0xff]
    %vm50 = vcmask 261120
    %v52 = vsel %vm50, %v24, 0
    %v55 = vsel %vm50, %v25, 0
    %v58 = vsel %vm50, %v26, 0
    %v61 = vsel %vm50, %v27, 0
    %v64 = vsel %vm50, %v28, 0
    %v67 = vsel %vm50, %v29, 0
    %v70 = vsel %vm50, %v30, 0
    %v73 = vsel %vm50, %v31, 0
    %v76 = vsel %vm50, %v32, 0
    %78 = vmatprep.subr.mxu0 %v46
    %79 = vmatpush1.msra.mxu0 %v41
    %80 = vmatprep.subr.mxu0 %v47
    %81 = vmatpush1.msra.mxu0 %v42
    %82 = vmatprep.subr.mxu0 %v48
    %83 = vmatpush1.msra.mxu0 %v43
    %84 = vmatprep.subr.mxu0 %v49
    %85 = vmatpush1.msra.mxu0 %v44
    %86 = vmatprep.subr.mxu0 0.0
    %87 = vmatpush1.msra.mxu0 0.0
    %88 = vmatprep.subr.mxu0 0.0
    %89 = vmatpush1.msra.mxu0 0.0
    %90 = vmatprep.subr.mxu0 0.0
    %91 = vmatpush1.msra.mxu0 0.0
    %92 = vmatprep.subr.mxu0 0.0
    %93 = vmatpush1.msra.mxu0 0.0
    %94 = vmatprep.subr.mxu0 0.0
    %95 = vmatpush1.msra.mxu0 0.0
    %96 = vmatprep.subr.mxu0 0.0
    %97 = vmatpush1.msra.mxu0 0.0
    %98 = vmatprep.subr.mxu0 0.0
    %99 = vmatpush1.msra.mxu0 0.0
    %100 = vmatprep.subr.mxu0 0.0
    %101 = vmatpush1.msra.mxu0 0.0
    %102 = vmatprep.subr.mxu0 0.0
    %103 = vmatpush1.msra.mxu0 0.0
    %104 = vmatprep.subr.mxu0 0.0
    %105 = vmatpush1.msra.mxu0 0.0
    %106 = vmatprep.subr.mxu0 0.0
    %107 = vmatpush1.msra.mxu0 0.0
    %108 = vmatprep.subr.mxu0 0.0
    %109 = vmatpush1.msra.mxu0 0.0
    %110 = vmatprep.subr.mxu0 0.0
    %111 = vmatpush1.msra.mxu0 0.0
    %112 = vmatprep.subr.mxu0 0.0
    %113 = vmatpush1.msra.mxu0 0.0
    %114 = vmatprep.subr.mxu0 0.0
    %115 = vmatpush1.msra.mxu0 0.0
    %116 = vmatprep.subr.mxu0 0.0
    %117 = vmatpush1.msra.mxu0 0.0
    %118 = vmatprep.subr.mxu0 0.0
    %119 = vmatpush1.msra.mxu0 0.0
    %120 = vmatprep.subr.mxu0 0.0
    %121 = vmatpush1.msra.mxu0 0.0
    %122 = vmatprep.subr.mxu0 0.0
    %123 = vmatpush1.msra.mxu0 0.0
    %124 = vmatprep.subr.mxu0 0.0
    %125 = vmatpush1.msra.mxu0 0.0
    %126 = vmatprep.subr.mxu0 0.0
    %127 = vmatpush1.msra.mxu0 0.0
    %128 = vmatprep.subr.mxu0 0.0
    %129 = vmatpush1.msra.mxu0 0.0
    %130 = vmatprep.subr.mxu0 0.0
    %131 = vmatpush1.msra.mxu0 0.0
    %132 = vmatprep.subr.mxu0 0.0
    %133 = vmatpush1.msra.mxu0 0.0
    %134 = vmatprep.subr.mxu0 0.0
    %135 = vmatpush1.msra.mxu0 0.0
    %136 = vmatprep.subr.mxu0 0.0
    %137 = vmatpush1.msra.mxu0 0.0
    %138 = vmatprep.subr.mxu0 0.0
    %139 = vmatpush1.msra.mxu0 0.0
    %140 = vmatprep.subr.mxu0 0.0
    %141 = vmatpush1.msra.mxu0 0.0
    %142 = vmatprep.mubr.f32.mxu0 0.0
    %143 = vmatmul.mubr.f32.gmra.mrb[0].mxu0 %v52
    %v144 = vpop.f32.mrb[0].mxu0
    %v145 = vadd.f32 0.0, %v144
    %v146 = vpop.f32.mrb[0].mxu0
    %v147 = vadd.f32 0.0, %v146
    %148 = vmatprep.mubr.f32.mxu0 0.0
    %149 = vmatmul.mubr.f32.gmra.mrb[0].mxu0 %v55
    %v150 = vpop.f32.mrb[0].mxu0
    %v151 = vadd.f32 0.0, %v150
    %v152 = vpop.f32.mrb[0].mxu0
    %v153 = vadd.f32 0.0, %v152
    %154 = vmatprep.mubr.f32.mxu0 0.0
    %155 = vmatmul.mubr.f32.gmra.mrb[0].mxu0 %v58
    %v156 = vpop.f32.mrb[0].mxu0
    %v157 = vadd.f32 0.0, %v156
    %v158 = vpop.f32.mrb[0].mxu0
    %v159 = vadd.f32 0.0, %v158
    %160 = vmatprep.mubr.f32.mxu0 0.0
    %161 = vmatmul.mubr.f32.gmra.mrb[0].mxu0 %v61
    %v162 = vpop.f32.mrb[0].mxu0
    %v163 = vadd.f32 0.0, %v162
    %v164 = vpop.f32.mrb[0].mxu0
    %v165 = vadd.f32 0.0, %v164
    %166 = vmatprep.mubr.f32.mxu0 0.0
    %167 = vmatmul.mubr.f32.gmra.mrb[0].mxu0 %v64
    %v168 = vpop.f32.mrb[0].mxu0
    %v169 = vadd.f32 0.0, %v168
    %v170 = vpop.f32.mrb[0].mxu0
    %v171 = vadd.f32 0.0, %v170
    %172 = vmatprep.mubr.f32.mxu0 0.0
    %173 = vmatmul.mubr.f32.gmra.mrb[0].mxu0 %v67
    %v174 = vpop.f32.mrb[0].mxu0
    %v175 = vadd.f32 0.0, %v174
    %v176 = vpop.f32.mrb[0].mxu0
    %v177 = vadd.f32 0.0, %v176
    %178 = vmatprep.mubr.f32.mxu0 0.0
    %179 = vmatmul.mubr.f32.gmra.mrb[0].mxu0 %v70
    %v180 = vpop.f32.mrb[0].mxu0
    %v181 = vadd.f32 0.0, %v180
    %v182 = vpop.f32.mrb[0].mxu0
    %v183 = vadd.f32 0.0, %v182
    %184 = vmatprep.mubr.f32.mxu0 0.0
    %185 = vmatmul.mubr.f32.gmra.mrb[0].mxu0 %v73
    %v186 = vpop.f32.mrb[0].mxu0
    %v187 = vadd.f32 0.0, %v186
    %v188 = vpop.f32.mrb[0].mxu0
    %v189 = vadd.f32 0.0, %v188
    %190 = vmatprep.mubr.f32.mxu0 0.0
    %191 = vmatmul.mubr.f32.gmra.mrb[0].mxu0 %v76
    %v192 = vpop.f32.mrb[0].mxu0
    %v193 = vadd.f32 0.0, %v192
    %v194 = vpop.f32.mrb[0].mxu0
    %v195 = vadd.f32 0.0, %v194
    %196 = vdwg.mxu0
    %197 = vxpose.xlu0.b32.start [1/16] %v145, 128
    %198 = vxpose.xlu0.b32.cont [2/16] 0.0, 128
    %199 = vxpose.xlu0.b32.cont [3/16] 0.0, 128
    %200 = vxpose.xlu0.b32.cont [4/16] 0.0, 128
    %201 = vxpose.xlu0.b32.cont [5/16] 0.0, 128
    %202 = vxpose.xlu0.b32.cont [6/16] 0.0, 128
    %203 = vxpose.xlu0.b32.cont [7/16] 0.0, 128
    %204 = vxpose.xlu0.b32.cont [8/16] 0.0, 128
    %205 = vxpose.xlu0.b32.cont [9/16] 0.0, 128
    %206 = vxpose.xlu0.b32.cont [10/16] 0.0, 128
    %207 = vxpose.xlu0.b32.cont [11/16] 0.0, 128
    %208 = vxpose.xlu0.b32.cont [12/16] 0.0, 128
    %209 = vxpose.xlu0.b32.cont [13/16] 0.0, 128
    %210 = vxpose.xlu0.b32.cont [14/16] 0.0, 128
    %211 = vxpose.xlu0.b32.cont [15/16] 0.0, 128
    %212 = vxpose.xlu0.b32.end [16/16] 0.0, 128
    %v213 = vpop.trf.xlu0
    %v214 = vpop.trf.xlu0
    %v215 = vpop.trf.xlu0
    %v216 = vpop.trf.xlu0
    %v217 = vpop.trf.xlu0
    %v218 = vpop.trf.xlu0
    %v219 = vpop.trf.xlu0
    %v220 = vpop.trf.xlu0
    %v221 = vpop.trf.xlu0
    %v222 = vpop.trf.xlu0
    %v223 = vpop.trf.xlu0
    %v224 = vpop.trf.xlu0
    %v225 = vpop.trf.xlu0
    %v226 = vpop.trf.xlu0
    %v227 = vpop.trf.xlu0
    %v228 = vpop.trf.xlu0
    %vm229 = vcmask 64512
    %v231 = vsel %vm229, %v213, 0
    %v234 = vsel %vm229, %v214, 0
    %v237 = vsel %vm229, %v215, 0
    %v240 = vsel %vm229, %v216, 0
    %v243 = vsel %vm229, %v217, 0
    %v246 = vsel %vm229, %v218, 0
    %v249 = vsel %vm229, %v219, 0
    %v252 = vsel %vm229, %v220, 0
    %v255 = vsel %vm229, %v221, 0
    %v258 = vsel %vm229, %v222, 0
    %v261 = vsel %vm229, %v223, 0
    %v264 = vsel %vm229, %v224, 0
    %v267 = vsel %vm229, %v225, 0
    %v270 = vsel %vm229, %v226, 0
    %v273 = vsel %vm229, %v227, 0
    %v276 = vsel %vm229, %v228, 0
    %278 = vmatprep.subr.mxu0 0.0
    %279 = vmatpush1.msra.mxu0 %v145
    %280 = vmatprep.subr.mxu0 0.0
    %281 = vmatpush1.msra.mxu0 0.0
    %282 = vmatprep.subr.mxu0 0.0
    %283 = vmatpush1.msra.mxu0 0.0
    %284 = vmatprep.subr.mxu0 0.0
    %285 = vmatpush1.msra.mxu0 0.0
    %286 = vmatprep.subr.mxu0 0.0
    %287 = vmatpush1.msra.mxu0 0.0
    %288 = vmatprep.subr.mxu0 0.0
    %289 = vmatpush1.msra.mxu0 0.0
    %290 = vmatprep.subr.mxu0 0.0
    %291 = vmatpush1.msra.mxu0 0.0
    %292 = vmatprep.subr.mxu0 0.0
    %293 = vmatpush1.msra.mxu0 0.0
    %294 = vmatprep.subr.mxu0 0.0
    %295 = vmatpush1.msra.mxu0 0.0
    %296 = vmatprep.subr.mxu0 0.0
    %297 = vmatpush1.msra.mxu0 0.0
    %298 = vmatprep.subr.mxu0 0.0
    %299 = vmatpush1.msra.mxu0 0.0
    %300 = vmatprep.subr.mxu0 0.0
    %301 = vmatpush1.msra.mxu0 0.0
    %302 = vmatprep.subr.mxu0 0.0
    %303 = vmatpush1.msra.mxu0 0.0
    %304 = vmatprep.subr.mxu0 0.0
    %305 = vmatpush1.msra.mxu0 0.0
    %306 = vmatprep.subr.mxu0 0.0
    %307 = vmatpush1.msra.mxu0 0.0
    %308 = vmatprep.subr.mxu0 0.0
    %309 = vmatpush1.msra.mxu0 0.0
    %310 = vmatprep.subr.mxu0 0.0
    %311 = vmatpush1.msra.mxu0 0.0
    %312 = vmatprep.subr.mxu0 0.0
    %313 = vmatpush1.msra.mxu0 0.0
    %314 = vmatprep.subr.mxu0 0.0
    %315 = vmatpush1.msra.mxu0 0.0
    %316 = vmatprep.subr.mxu0 0.0
    %317 = vmatpush1.msra.mxu0 0.0
    %318 = vmatprep.subr.mxu0 0.0
    %319 = vmatpush1.msra.mxu0 0.0
    %320 = vmatprep.subr.mxu0 0.0
    %321 = vmatpush1.msra.mxu0 0.0
    %322 = vmatprep.subr.mxu0 0.0
    %323 = vmatpush1.msra.mxu0 0.0
    %324 = vmatprep.subr.mxu0 0.0
    %325 = vmatpush1.msra.mxu0 0.0
    %326 = vmatprep.subr.mxu0 0.0
    %327 = vmatpush1.msra.mxu0 0.0
    %328 = vmatprep.subr.mxu0 0.0
    %329 = vmatpush1.msra.mxu0 0.0
    %330 = vmatprep.subr.mxu0 0.0
    %331 = vmatpush1.msra.mxu0 0.0
    %332 = vmatprep.subr.mxu0 0.0
    %333 = vmatpush1.msra.mxu0 0.0
    %334 = vmatprep.subr.mxu0 0.0
    %335 = vmatpush1.msra.mxu0 0.0
    %336 = vmatprep.subr.mxu0 0.0
    %337 = vmatpush1.msra.mxu0 0.0
    %338 = vmatprep.subr.mxu0 0.0
    %339 = vmatpush1.msra.mxu0 0.0
    %340 = vmatprep.subr.mxu0 0.0
    %341 = vmatpush1.msra.mxu0 0.0
    %342 = vmatprep.mubr.f32.mxu0 0.0
    %343 = vmatmul.mubr.f32.gmra.mrb[0].mxu0 %v231
    %v344 = vpop.f32.mrb[0].mxu0
    %v345 = vadd.f32 0.0, %v344
    %v346 = vpop.f32.mrb[0].mxu0
    %347 = vmatprep.mubr.f32.mxu0 0.0
    %348 = vmatmul.mubr.f32.gmra.mrb[0].mxu0 %v234
    %v349 = vpop.f32.mrb[0].mxu0
    %v350 = vadd.f32 0.0, %v349
    %v351 = vpop.f32.mrb[0].mxu0
    %352 = vmatprep.mubr.f32.mxu0 0.0
    %353 = vmatmul.mubr.f32.gmra.mrb[0].mxu0 %v237
    %v354 = vpop.f32.mrb[0].mxu0
    %v355 = vadd.f32 0.0, %v354
    %v356 = vpop.f32.mrb[0].mxu0
    %357 = vmatprep.mubr.f32.mxu0 0.0
    %358 = vmatmul.mubr.f32.gmra.mrb[0].mxu0 %v240
    %v359 = vpop.f32.mrb[0].mxu0
    %v360 = vadd.f32 0.0, %v359
    %v361 = vpop.f32.mrb[0].mxu0
    %362 = vmatprep.mubr.f32.mxu0 0.0
    %363 = vmatmul.mubr.f32.gmra.mrb[0].mxu0 %v243
    %v364 = vpop.f32.mrb[0].mxu0
    %v365 = vadd.f32 0.0, %v364
    %v366 = vpop.f32.mrb[0].mxu0
    %367 = vmatprep.mubr.f32.mxu0 0.0
    %368 = vmatmul.mubr.f32.gmra.mrb[0].mxu0 %v246
    %v369 = vpop.f32.mrb[0].mxu0
    %v370 = vadd.f32 0.0, %v369
    %v371 = vpop.f32.mrb[0].mxu0
    %372 = vmatprep.mubr.f32.mxu0 0.0
    %373 = vmatmul.mubr.f32.gmra.mrb[0].mxu0 %v249
    %v374 = vpop.f32.mrb[0].mxu0
    %v375 = vadd.f32 0.0, %v374
    %v376 = vpop.f32.mrb[0].mxu0
    %377 = vmatprep.mubr.f32.mxu0 0.0
    %378 = vmatmul.mubr.f32.gmra.mrb[0].mxu0 %v252
    %v379 = vpop.f32.mrb[0].mxu0
    %v380 = vadd.f32 0.0, %v379
    %v381 = vpop.f32.mrb[0].mxu0
    %382 = vmatprep.mubr.f32.mxu0 0.0
    %383 = vmatmul.mubr.f32.gmra.mrb[0].mxu0 %v255
    %v384 = vpop.f32.mrb[0].mxu0
    %v385 = vadd.f32 0.0, %v384
    %v386 = vpop.f32.mrb[0].mxu0
    %387 = vmatprep.mubr.f32.mxu0 0.0
    %388 = vmatmul.mubr.f32.gmra.mrb[0].mxu0 %v258
    %v389 = vpop.f32.mrb[0].mxu0
    %v390 = vadd.f32 0.0, %v389
    %v391 = vpop.f32.mrb[0].mxu0
    %392 = vmatprep.mubr.f32.mxu0 0.0
    %393 = vmatmul.mubr.f32.gmra.mrb[0].mxu0 %v261
    %v394 = vpop.f32.mrb[0].mxu0
    %v395 = vadd.f32 0.0, %v394
    %v396 = vpop.f32.mrb[0].mxu0
    %397 = vmatprep.mubr.f32.mxu0 0.0
    %398 = vmatmul.mubr.f32.gmra.mrb[0].mxu0 %v264
    %v399 = vpop.f32.mrb[0].mxu0
    %v400 = vadd.f32 0.0, %v399
    %v401 = vpop.f32.mrb[0].mxu0
    %402 = vmatprep.mubr.f32.mxu0 0.0
    %403 = vmatmul.mubr.f32.gmra.mrb[0].mxu0 %v267
    %v404 = vpop.f32.mrb[0].mxu0
    %v405 = vadd.f32 0.0, %v404
    %v406 = vpop.f32.mrb[0].mxu0
    %407 = vmatprep.mubr.f32.mxu0 0.0
    %408 = vmatmul.mubr.f32.gmra.mrb[0].mxu0 %v270
    %v409 = vpop.f32.mrb[0].mxu0
    %v410 = vadd.f32 0.0, %v409
    %v411 = vpop.f32.mrb[0].mxu0
    %412 = vmatprep.mubr.f32.mxu0 0.0
    %413 = vmatmul.mubr.f32.gmra.mrb[0].mxu0 %v273
    %v414 = vpop.f32.mrb[0].mxu0
    %v415 = vadd.f32 0.0, %v414
    %v416 = vpop.f32.mrb[0].mxu0
    %417 = vmatprep.mubr.f32.mxu0 0.0
    %418 = vmatmul.mubr.f32.gmra.mrb[0].mxu0 %v276
    %v419 = vpop.f32.mrb[0].mxu0
    %v420 = vadd.f32 0.0, %v419
    %v421 = vpop.f32.mrb[0].mxu0
    %422 = vdwg.mxu0
    %423 = vmax.xlane.f32.xlu0 %v345
    %v424 = vpop.xlane.xlu0 %423
    %425 = vmax.xlane.f32.xlu0 %v350
    %v426 = vpop.xlane.xlu0 %425
    %427 = vmax.xlane.f32.xlu0 %v355
    %v428 = vpop.xlane.xlu0 %427
    %429 = vmax.xlane.f32.xlu0 %v360
    %v430 = vpop.xlane.xlu0 %429
    %431 = vmax.xlane.f32.xlu0 %v365
    %v432 = vpop.xlane.xlu0 %431
    %433 = vmax.xlane.f32.xlu0 %v370
    %v434 = vpop.xlane.xlu0 %433
    %435 = vmax.xlane.f32.xlu0 %v375
    %v436 = vpop.xlane.xlu0 %435
    %437 = vmax.xlane.f32.xlu0 %v380
    %v438 = vpop.xlane.xlu0 %437
    %439 = vmax.xlane.f32.xlu0 %v385
    %v440 = vpop.xlane.xlu0 %439
    %441 = vmax.xlane.f32.xlu0 %v390
    %v442 = vpop.xlane.xlu0 %441
    %443 = vmax.xlane.f32.xlu0 %v395
    %v444 = vpop.xlane.xlu0 %443
    %445 = vmax.xlane.f32.xlu0 %v400
    %v446 = vpop.xlane.xlu0 %445
    %447 = vmax.xlane.f32.xlu0 %v405
    %v448 = vpop.xlane.xlu0 %447
    %449 = vmax.xlane.f32.xlu0 %v410
    %v450 = vpop.xlane.xlu0 %449
    %451 = vmax.xlane.f32.xlu0 %v415
    %v452 = vpop.xlane.xlu0 %451
    %453 = vmax.xlane.f32.xlu0 %v420
    %v454 = vpop.xlane.xlu0 %453
    %v455 = vsub.f32 %v345, %v424
    %v456 = vsub.f32 %v350, %v426
    %v457 = vsub.f32 %v355, %v428
    %v458 = vsub.f32 %v360, %v430
    %v459 = vsub.f32 %v365, %v432
    %v460 = vsub.f32 %v370, %v434
    %v461 = vsub.f32 %v375, %v436
    %v462 = vsub.f32 %v380, %v438
    %v463 = vsub.f32 %v385, %v440
    %v464 = vsub.f32 %v390, %v442
    %v465 = vsub.f32 %v395, %v444
    %v466 = vsub.f32 %v400, %v446
    %v467 = vsub.f32 %v405, %v448
    %v468 = vsub.f32 %v410, %v450
    %v469 = vsub.f32 %v415, %v452
    %v470 = vsub.f32 %v420, %v454
    %v471 = vmul.f32 %v455, 1.442695
    %v472 = vpow.pop %v471
    %v473 = vmul.f32 %v456, 1.442695
    %v474 = vpow.pop %v473
    %v475 = vmul.f32 %v457, 1.442695
    %v476 = vpow.pop %v475
    %v477 = vmul.f32 %v458, 1.442695
    %v478 = vpow.pop %v477
    %v479 = vmul.f32 %v459, 1.442695
    %v480 = vpow.pop %v479
    %v481 = vmul.f32 %v460, 1.442695
    %v482 = vpow.pop %v481
    %v483 = vmul.f32 %v461, 1.442695
    %v484 = vpow.pop %v483
    %v485 = vmul.f32 %v462, 1.442695
    %v486 = vpow.pop %v485
    %v487 = vmul.f32 %v463, 1.442695
    %v488 = vpow.pop %v487
    %v489 = vmul.f32 %v464, 1.442695
    %v490 = vpow.pop %v489
    %v491 = vmul.f32 %v465, 1.442695
    %v492 = vpow.pop %v491
    %v493 = vmul.f32 %v466, 1.442695
    %v494 = vpow.pop %v493
    %v495 = vmul.f32 %v467, 1.442695
    %v496 = vpow.pop %v495
    %v497 = vmul.f32 %v468, 1.442695
    %v498 = vpow.pop %v497
    %v499 = vmul.f32 %v469, 1.442695
    %v500 = vpow.pop %v499
    %v501 = vmul.f32 %v470, 1.442695
    %v502 = vpow.pop %v501
    %503 = vadd.xlane.f32.xlu0 %v472
    %v504 = vpop.xlane.xlu0 %503
    %505 = vadd.xlane.f32.xlu0 %v474
    %v506 = vpop.xlane.xlu0 %505
    %507 = vadd.xlane.f32.xlu0 %v476
    %v508 = vpop.xlane.xlu0 %507
    %509 = vadd.xlane.f32.xlu0 %v478
    %v510 = vpop.xlane.xlu0 %509
    %511 = vadd.xlane.f32.xlu0 %v480
    %v512 = vpop.xlane.xlu0 %511
    %513 = vadd.xlane.f32.xlu0 %v482
    %v514 = vpop.xlane.xlu0 %513
    %515 = vadd.xlane.f32.xlu0 %v484
    %v516 = vpop.xlane.xlu0 %515
    %517 = vadd.xlane.f32.xlu0 %v486
    %v518 = vpop.xlane.xlu0 %517
    %519 = vadd.xlane.f32.xlu0 %v488
    %v520 = vpop.xlane.xlu0 %519
    %521 = vadd.xlane.f32.xlu0 %v490
    %v522 = vpop.xlane.xlu0 %521
    %523 = vadd.xlane.f32.xlu0 %v492
    %v524 = vpop.xlane.xlu0 %523
    %525 = vadd.xlane.f32.xlu0 %v494
    %v526 = vpop.xlane.xlu0 %525
    %527 = vadd.xlane.f32.xlu0 %v496
    %v528 = vpop.xlane.xlu0 %527
    %529 = vadd.xlane.f32.xlu0 %v498
    %v530 = vpop.xlane.xlu0 %529
    %531 = vadd.xlane.f32.xlu0 %v500
    %v532 = vpop.xlane.xlu0 %531
    %533 = vadd.xlane.f32.xlu0 %v502
    %v534 = vpop.xlane.xlu0 %533
    %v535 = vrcp.pop %v504
    %v536 = vrcp.pop %v506
    %v537 = vrcp.pop %v508
    %v538 = vrcp.pop %v510
    %v539 = vrcp.pop %v512
    %v540 = vrcp.pop %v514
    %v541 = vrcp.pop %v516
    %v542 = vrcp.pop %v518
    %v543 = vrcp.pop %v520
    %v544 = vrcp.pop %v522
    %v545 = vrcp.pop %v524
    %v546 = vrcp.pop %v526
    %v547 = vrcp.pop %v528
    %v548 = vrcp.pop %v530
    %v549 = vrcp.pop %v532
    %v550 = vrcp.pop %v534
    %v551 = vmul.f32 %v472, %v535
    %v552 = vmul.f32 %v474, %v536
    %v553 = vmul.f32 %v476, %v537
    %v554 = vmul.f32 %v478, %v538
    %v555 = vmul.f32 %v480, %v539
    %v556 = vmul.f32 %v482, %v540
    %v557 = vmul.f32 %v484, %v541
    %v558 = vmul.f32 %v486, %v542
    %v559 = vmul.f32 %v488, %v543
    %v560 = vmul.f32 %v490, %v544
    %v561 = vmul.f32 %v492, %v545
    %v562 = vmul.f32 %v494, %v546
    %v563 = vmul.f32 %v496, %v547
    %v564 = vmul.f32 %v498, %v548
    %v565 = vmul.f32 %v500, %v549
    %v566 = vmul.f32 %v502, %v550
    %v567 = vadd.f32 %v551, %v552
    %v568 = vadd.f32 %v567, %v553
    %v569 = vadd.f32 %v568, %v554
    %v570 = vadd.f32 %v569, %v555
    %v571 = vadd.f32 %v570, %v556
    %v572 = vadd.f32 %v571, %v557
    %v573 = vadd.f32 %v572, %v558
    %v574 = vadd.f32 %v573, %v559
    %v575 = vadd.f32 %v574, %v560
    %v576 = vadd.f32 %v575, %v561
    %v577 = vadd.f32 %v576, %v562
    %v578 = vadd.f32 %v577, %v563
    %v579 = vadd.f32 %v578, %v564
    %v580 = vadd.f32 %v579, %v565
    %v581 = vadd.f32 %v580, %v566
    %v582 = vrot.slane %v581, 4
    %v583 = vadd.f32 %v581, %v582
    %v584 = vrot.slane %v583, 2
    %v585 = vadd.f32 %v583, %v584
    %v586 = vrot.slane %v585, 1
    %v587 = vadd.f32 %v585, %v586
    %v588 = vadd.f32 %v587, 1e-09
    %v589 = vrcp.pop %v588
    %v590 = vmul.f32 %v551, %v589
    %v591 = vmul.f32 %v552, %v589
    %v592 = vmul.f32 %v553, %v589
    %v593 = vmul.f32 %v554, %v589
    %v594 = vmul.f32 %v555, %v589
    %v595 = vmul.f32 %v556, %v589
    %v596 = vmul.f32 %v557, %v589
    %v597 = vmul.f32 %v558, %v589
    %v598 = vmul.f32 %v559, %v589
    %v599 = vmul.f32 %v560, %v589
    %v600 = vmul.f32 %v561, %v589
    %v601 = vmul.f32 %v562, %v589
    %v602 = vmul.f32 %v563, %v589
    %v603 = vmul.f32 %v564, %v589
    %v604 = vmul.f32 %v565, %v589
    %v605 = vmul.f32 %v566, %v589
    %v606 = vmul.f32 %v587, %v589
    %608 = vset.pattern.permute.xlu0 0
    %609 = vperm.xlu0 %608, %v37
    %v610 = vpop.permute.xlu0 %609
    %613 = vset.pattern.permute.xlu0 0
    %614 = vperm.xlu0 %613, %v38
    %v615 = vpop.permute.xlu0 %614
    %618 = vset.pattern.permute.xlu0 0
    %619 = vperm.xlu0 %618, %v39
    %v620 = vpop.permute.xlu0 %619
    %623 = vset.pattern.permute.xlu0 0
    %624 = vperm.xlu0 %623, %v40
    %v625 = vpop.permute.xlu0 %624
    %v627 = vadd.f32 %v175, %v610
    %v628 = vadd.f32 %v181, %v615
    %v629 = vadd.f32 %v187, %v620
    %v630 = vadd.f32 %v193, %v625
    %632 = vset.pattern.permute.xlu0 0
    %633 = vperm.xlu0 %632, %v33
    %v634 = vpop.permute.xlu0 %633
    %637 = vset.pattern.permute.xlu0 0
    %638 = vperm.xlu0 %637, %v34
    %v639 = vpop.permute.xlu0 %638
    %642 = vset.pattern.permute.xlu0 0
    %643 = vperm.xlu0 %642, %v35
    %v644 = vpop.permute.xlu0 %643
    %647 = vset.pattern.permute.xlu0 0
    %648 = vperm.xlu0 %647, %v36
    %v649 = vpop.permute.xlu0 %648
    %v651 = vmul.f32 %v634, %v606
    %v652 = vmul.f32 %v639, %v606
    %v653 = vmul.f32 %v644, %v606
    %v654 = vmul.f32 %v649, %v606
    %655 = vmatprep.subr.mxu0 0.0
    %656 = vmatpush1.msra.mxu0 %v590
    %657 = vmatprep.subr.mxu0 0.0
    %658 = vmatpush1.msra.mxu0 %v591
    %659 = vmatprep.subr.mxu0 0.0
    %660 = vmatpush1.msra.mxu0 %v592
    %661 = vmatprep.subr.mxu0 0.0
    %662 = vmatpush1.msra.mxu0 %v593
    %663 = vmatprep.subr.mxu0 0.0
    %664 = vmatpush1.msra.mxu0 %v594
    %665 = vmatprep.subr.mxu0 0.0
    %666 = vmatpush1.msra.mxu0 %v595
    %667 = vmatprep.subr.mxu0 0.0
    %668 = vmatpush1.msra.mxu0 %v596
    %669 = vmatprep.subr.mxu0 0.0
    %670 = vmatpush1.msra.mxu0 %v597
    %671 = vmatprep.subr.mxu0 0.0
    %672 = vmatpush1.msra.mxu0 %v598
    %673 = vmatprep.subr.mxu0 0.0
    %674 = vmatpush1.msra.mxu0 %v599
    %675 = vmatprep.subr.mxu0 0.0
    %676 = vmatpush1.msra.mxu0 %v600
    %677 = vmatprep.subr.mxu0 0.0
    %678 = vmatpush1.msra.mxu0 %v601
    %679 = vmatprep.subr.mxu0 0.0
    %680 = vmatpush1.msra.mxu0 %v602
    %681 = vmatprep.subr.mxu0 0.0
    %682 = vmatpush1.msra.mxu0 %v603
    %683 = vmatprep.subr.mxu0 0.0
    %684 = vmatpush1.msra.mxu0 %v604
    %685 = vmatprep.subr.mxu0 0.0
    %686 = vmatpush1.msra.mxu0 %v605
    %687 = vmatprep.subr.mxu0 0.0
    %688 = vmatpush1.msra.mxu0 0.0
    %689 = vmatprep.subr.mxu0 0.0
    %690 = vmatpush1.msra.mxu0 0.0
    %691 = vmatprep.subr.mxu0 0.0
    %692 = vmatpush1.msra.mxu0 0.0
    %693 = vmatprep.subr.mxu0 0.0
    %694 = vmatpush1.msra.mxu0 0.0
    %695 = vmatprep.subr.mxu0 0.0
    %696 = vmatpush1.msra.mxu0 0.0
    %697 = vmatprep.subr.mxu0 0.0
    %698 = vmatpush1.msra.mxu0 0.0
    %699 = vmatprep.subr.mxu0 0.0
    %700 = vmatpush1.msra.mxu0 0.0
    %701 = vmatprep.subr.mxu0 0.0
    %702 = vmatpush1.msra.mxu0 0.0
    %703 = vmatprep.subr.mxu0 0.0
    %704 = vmatpush1.msra.mxu0 0.0
    %705 = vmatprep.subr.mxu0 0.0
    %706 = vmatpush1.msra.mxu0 0.0
    %707 = vmatprep.subr.mxu0 0.0
    %708 = vmatpush1.msra.mxu0 0.0
    %709 = vmatprep.subr.mxu0 0.0
    %710 = vmatpush1.msra.mxu0 0.0
    %711 = vmatprep.subr.mxu0 0.0
    %712 = vmatpush1.msra.mxu0 0.0
    %713 = vmatprep.subr.mxu0 0.0
    %714 = vmatpush1.msra.mxu0 0.0
    %715 = vmatprep.subr.mxu0 0.0
    %716 = vmatpush1.msra.mxu0 0.0
    %717 = vmatprep.subr.mxu0 0.0
    %718 = vmatpush1.msra.mxu0 0.0
    %719 = vmatprep.mubr.f32.mxu0 0.0
    %720 = vmatmul.mubr.f32.gmra.mrb[0].mxu0 %v151
    %v721 = vpop.f32.mrb[0].mxu0
    %v722 = vadd.f32 %v651, %v721
    %v723 = vpop.f32.mrb[0].mxu0
    %724 = vmatprep.mubr.f32.mxu0 0.0
    %725 = vmatmul.mubr.f32.gmra.mrb[0].mxu0 %v157
    %v726 = vpop.f32.mrb[0].mxu0
    %v727 = vadd.f32 %v652, %v726
    %v728 = vpop.f32.mrb[0].mxu0
    %729 = vmatprep.mubr.f32.mxu0 0.0
    %730 = vmatmul.mubr.f32.gmra.mrb[0].mxu0 %v163
    %v731 = vpop.f32.mrb[0].mxu0
    %v732 = vadd.f32 %v653, %v731
    %v733 = vpop.f32.mrb[0].mxu0
    %734 = vmatprep.mubr.f32.mxu0 0.0
    %735 = vmatmul.mubr.f32.gmra.mrb[0].mxu0 %v169
    %v736 = vpop.f32.mrb[0].mxu0
    %v737 = vadd.f32 %v654, %v736
    %v738 = vpop.f32.mrb[0].mxu0
    %739 = vdwg.mxu0
    %v740 = vsub.f32 %v627, %v722
    %v741 = vsub.f32 %v628, %v727
    %v742 = vsub.f32 %v629, %v732
    %v743 = vsub.f32 %v630, %v737
    %744 = vst [vmem:[#allocation2] sm:$0xff] %v740
    %745 = vst [vmem:[#allocation2 + $0x8] sm:$0xff] %v741
    %746 = vst [vmem:[#allocation2 + $0x10] sm:$0xff] %v742
    %747 = vst [vmem:[#allocation2 + $0x18] sm:$0xff] %v743
    %748 = vadd.xlane.f32.xlu0 %v740
    %v749 = vpop.xlane.xlu0 %748
    %750 = vadd.xlane.f32.xlu0 %v741
    %v751 = vpop.xlane.xlu0 %750
    %752 = vadd.xlane.f32.xlu0 %v742
    %v753 = vpop.xlane.xlu0 %752
    %754 = vadd.xlane.f32.xlu0 %v743
    %v755 = vpop.xlane.xlu0 %754
    %v756 = vadd.f32 %v749, 0.0
    %v757 = vadd.f32 %v751, 0.0
    %v758 = vadd.f32 %v753, 0.0
    %v759 = vadd.f32 %v755, 0.0
    %v760 = vmul.f32 %v740, %v740
    %v761 = vmul.f32 %v741, %v741
    %v762 = vmul.f32 %v742, %v742
    %v763 = vmul.f32 %v743, %v743
    %764 = vadd.xlane.f32.xlu0 %v760
    %v765 = vpop.xlane.xlu0 %764
    %766 = vadd.xlane.f32.xlu0 %v761
    %v767 = vpop.xlane.xlu0 %766
    %768 = vadd.xlane.f32.xlu0 %v762
    %v769 = vpop.xlane.xlu0 %768
    %770 = vadd.xlane.f32.xlu0 %v763
    %v771 = vpop.xlane.xlu0 %770
    %v772 = vadd.f32 %v765, 0.0
    %v773 = vadd.f32 %v767, 0.0
    %v774 = vadd.f32 %v769, 0.0
    %v775 = vadd.f32 %v771, 0.0
    %776 = vxpose.xlu0.b32.start [1/16] %v147, 128
    %777 = vxpose.xlu0.b32.cont [2/16] 0.0, 128
    %778 = vxpose.xlu0.b32.cont [3/16] 0.0, 128
    %779 = vxpose.xlu0.b32.cont [4/16] 0.0, 128
    %780 = vxpose.xlu0.b32.cont [5/16] 0.0, 128
    %781 = vxpose.xlu0.b32.cont [6/16] 0.0, 128
    %782 = vxpose.xlu0.b32.cont [7/16] 0.0, 128
    %783 = vxpose.xlu0.b32.cont [8/16] 0.0, 128
    %784 = vxpose.xlu0.b32.cont [9/16] 0.0, 128
    %785 = vxpose.xlu0.b32.cont [10/16] 0.0, 128
    %786 = vxpose.xlu0.b32.cont [11/16] 0.0, 128
    %787 = vxpose.xlu0.b32.cont [12/16] 0.0, 128
    %788 = vxpose.xlu0.b32.cont [13/16] 0.0, 128
    %789 = vxpose.xlu0.b32.cont [14/16] 0.0, 128
    %790 = vxpose.xlu0.b32.cont [15/16] 0.0, 128
    %791 = vxpose.xlu0.b32.end [16/16] 0.0, 128
    %v792 = vpop.trf.xlu0
    %v793 = vpop.trf.xlu0
    %v794 = vpop.trf.xlu0
    %v795 = vpop.trf.xlu0
    %v796 = vpop.trf.xlu0
    %v797 = vpop.trf.xlu0
    %v798 = vpop.trf.xlu0
    %v799 = vpop.trf.xlu0
    %v800 = vpop.trf.xlu0
    %v801 = vpop.trf.xlu0
    %v802 = vpop.trf.xlu0
    %v803 = vpop.trf.xlu0
    %v804 = vpop.trf.xlu0
    %v805 = vpop.trf.xlu0
    %v806 = vpop.trf.xlu0
    %v807 = vpop.trf.xlu0
    %v809 = vsel %vm229, %v792, 0
    %v812 = vsel %vm229, %v793, 0
    %v815 = vsel %vm229, %v794, 0
    %v818 = vsel %vm229, %v795, 0
    %v821 = vsel %vm229, %v796, 0
    %v824 = vsel %vm229, %v797, 0
    %v827 = vsel %vm229, %v798, 0
    %v830 = vsel %vm229, %v799, 0
    %v833 = vsel %vm229, %v800, 0
    %v836 = vsel %vm229, %v801, 0
    %v839 = vsel %vm229, %v802, 0
    %v842 = vsel %vm229, %v803, 0
    %v845 = vsel %vm229, %v804, 0
    %v848 = vsel %vm229, %v805, 0
    %v851 = vsel %vm229, %v806, 0
    %v854 = vsel %vm229, %v807, 0
    %856 = vmatprep.subr.mxu0 0.0
    %857 = vmatpush1.msra.mxu0 %v147
    %858 = vmatprep.subr.mxu0 0.0
    %859 = vmatpush1.msra.mxu0 0.0
    %860 = vmatprep.subr.mxu0 0.0
    %861 = vmatpush1.msra.mxu0 0.0
    %862 = vmatprep.subr.mxu0 0.0
    %863 = vmatpush1.msra.mxu0 0.0
    %864 = vmatprep.subr.mxu0 0.0
    %865 = vmatpush1.msra.mxu0 0.0
    %866 = vmatprep.subr.mxu0 0.0
    %867 = vmatpush1.msra.mxu0 0.0
    %868 = vmatprep.subr.mxu0 0.0
    %869 = vmatpush1.msra.mxu0 0.0
    %870 = vmatprep.subr.mxu0 0.0
    %871 = vmatpush1.msra.mxu0 0.0
    %872 = vmatprep.subr.mxu0 0.0
    %873 = vmatpush1.msra.mxu0 0.0
    %874 = vmatprep.subr.mxu0 0.0
    %875 = vmatpush1.msra.mxu0 0.0
    %876 = vmatprep.subr.mxu0 0.0
    %877 = vmatpush1.msra.mxu0 0.0
    %878 = vmatprep.subr.mxu0 0.0
    %879 = vmatpush1.msra.mxu0 0.0
    %880 = vmatprep.subr.mxu0 0.0
    %881 = vmatpush1.msra.mxu0 0.0
    %882 = vmatprep.subr.mxu0 0.0
    %883 = vmatpush1.msra.mxu0 0.0
    %884 = vmatprep.subr.mxu0 0.0
    %885 = vmatpush1.msra.mxu0 0.0
    %886 = vmatprep.subr.mxu0 0.0
    %887 = vmatpush1.msra.mxu0 0.0
    %888 = vmatprep.subr.mxu0 0.0
    %889 = vmatpush1.msra.mxu0 0.0
    %890 = vmatprep.subr.mxu0 0.0
    %891 = vmatpush1.msra.mxu0 0.0
    %892 = vmatprep.subr.mxu0 0.0
    %893 = vmatpush1.msra.mxu0 0.0
    %894 = vmatprep.subr.mxu0 0.0
    %895 = vmatpush1.msra.mxu0 0.0
    %896 = vmatprep.subr.mxu0 0.0
    %897 = vmatpush1.msra.mxu0 0.0
    %898 = vmatprep.subr.mxu0 0.0
    %899 = vmatpush1.msra.mxu0 0.0
    %900 = vmatprep.subr.mxu0 0.0
    %901 = vmatpush1.msra.mxu0 0.0
    %902 = vmatprep.subr.mxu0 0.0
    %903 = vmatpush1.msra.mxu0 0.0
    %904 = vmatprep.subr.mxu0 0.0
    %905 = vmatpush1.msra.mxu0 0.0
    %906 = vmatprep.subr.mxu0 0.0
    %907 = vmatpush1.msra.mxu0 0.0
    %908 = vmatprep.subr.mxu0 0.0
    %909 = vmatpush1.msra.mxu0 0.0
    %910 = vmatprep.subr.mxu0 0.0
    %911 = vmatpush1.msra.mxu0 0.0
    %912 = vmatprep.subr.mxu0 0.0
    %913 = vmatpush1.msra.mxu0 0.0
    %914 = vmatprep.subr.mxu0 0.0
    %915 = vmatpush1.msra.mxu0 0.0
    %916 = vmatprep.subr.mxu0 0.0
    %917 = vmatpush1.msra.mxu0 0.0
    %918 = vmatprep.subr.mxu0 0.0
    %919 = vmatpush1.msra.mxu0 0.0
    %920 = vmatprep.mubr.f32.mxu0 0.0
    %921 = vmatmul.mubr.f32.gmra.mrb[0].mxu0 %v809
    %v922 = vpop.f32.mrb[0].mxu0
    %v923 = vadd.f32 0.0, %v922
    %v924 = vpop.f32.mrb[0].mxu0
    %925 = vmatprep.mubr.f32.mxu0 0.0
    %926 = vmatmul.mubr.f32.gmra.mrb[0].mxu0 %v812
    %v927 = vpop.f32.mrb[0].mxu0
    %v928 = vadd.f32 0.0, %v927
    %v929 = vpop.f32.mrb[0].mxu0
    %930 = vmatprep.mubr.f32.mxu0 0.0
    %931 = vmatmul.mubr.f32.gmra.mrb[0].mxu0 %v815
    %v932 = vpop.f32.mrb[0].mxu0
    %v933 = vadd.f32 0.0, %v932
    %v934 = vpop.f32.mrb[0].mxu0
    %935 = vmatprep.mubr.f32.mxu0 0.0
    %936 = vmatmul.mubr.f32.gmra.mrb[0].mxu0 %v818
    %v937 = vpop.f32.mrb[0].mxu0
    %v938 = vadd.f32 0.0, %v937
    %v939 = vpop.f32.mrb[0].mxu0
    %940 = vmatprep.mubr.f32.mxu0 0.0
    %941 = vmatmul.mubr.f32.gmra.mrb[0].mxu0 %v821
    %v942 = vpop.f32.mrb[0].mxu0
    %v943 = vadd.f32 0.0, %v942
    %v944 = vpop.f32.mrb[0].mxu0
    %945 = vmatprep.mubr.f32.mxu0 0.0
    %946 = vmatmul.mubr.f32.gmra.mrb[0].mxu0 %v824
    %v947 = vpop.f32.mrb[0].mxu0
    %v948 = vadd.f32 0.0, %v947
    %v949 = vpop.f32.mrb[0].mxu0
    %950 = vmatprep.mubr.f32.mxu0 0.0
    %951 = vmatmul.mubr.f32.gmra.mrb[0].mxu0 %v827
    %v952 = vpop.f32.mrb[0].mxu0
    %v953 = vadd.f32 0.0, %v952
    %v954 = vpop.f32.mrb[0].mxu0
    %955 = vmatprep.mubr.f32.mxu0 0.0
    %956 = vmatmul.mubr.f32.gmra.mrb[0].mxu0 %v830
    %v957 = vpop.f32.mrb[0].mxu0
    %v958 = vadd.f32 0.0, %v957
    %v959 = vpop.f32.mrb[0].mxu0
    %960 = vmatprep.mubr.f32.mxu0 0.0
    %961 = vmatmul.mubr.f32.gmra.mrb[0].mxu0 %v833
    %v962 = vpop.f32.mrb[0].mxu0
    %v963 = vadd.f32 0.0, %v962
    %v964 = vpop.f32.mrb[0].mxu0
    %965 = vmatprep.mubr.f32.mxu0 0.0
    %966 = vmatmul.mubr.f32.gmra.mrb[0].mxu0 %v836
    %v967 = vpop.f32.mrb[0].mxu0
    %v968 = vadd.f32 0.0, %v967
    %v969 = vpop.f32.mrb[0].mxu0
    %970 = vmatprep.mubr.f32.mxu0 0.0
    %971 = vmatmul.mubr.f32.gmra.mrb[0].mxu0 %v839
    %v972 = vpop.f32.mrb[0].mxu0
    %v973 = vadd.f32 0.0, %v972
    %v974 = vpop.f32.mrb[0].mxu0
    %975 = vmatprep.mubr.f32.mxu0 0.0
    %976 = vmatmul.mubr.f32.gmra.mrb[0].mxu0 %v842
    %v977 = vpop.f32.mrb[0].mxu0
    %v978 = vadd.f32 0.0, %v977
    %v979 = vpop.f32.mrb[0].mxu0
    %980 = vmatprep.mubr.f32.mxu0 0.0
    %981 = vmatmul.mubr.f32.gmra.mrb[0].mxu0 %v845
    %v982 = vpop.f32.mrb[0].mxu0
    %v983 = vadd.f32 0.0, %v982
    %v984 = vpop.f32.mrb[0].mxu0
    %985 = vmatprep.mubr.f32.mxu0 0.0
    %986 = vmatmul.mubr.f32.gmra.mrb[0].mxu0 %v848
    %v987 = vpop.f32.mrb[0].mxu0
    %v988 = vadd.f32 0.0, %v987
    %v989 = vpop.f32.mrb[0].mxu0
    %990 = vmatprep.mubr.f32.mxu0 0.0
    %991 = vmatmul.mubr.f32.gmra.mrb[0].mxu0 %v851
    %v992 = vpop.f32.mrb[0].mxu0
    %v993 = vadd.f32 0.0, %v992
    %v994 = vpop.f32.mrb[0].mxu0
    %995 = vmatprep.mubr.f32.mxu0 0.0
    %996 = vmatmul.mubr.f32.gmra.mrb[0].mxu0 %v854
    %v997 = vpop.f32.mrb[0].mxu0
    %v998 = vadd.f32 0.0, %v997
    %v999 = vpop.f32.mrb[0].mxu0
    %1000 = vdwg.mxu0
    %1001 = vmax.xlane.f32.xlu0 %v923
    %v1002 = vpop.xlane.xlu0 %1001
    %1003 = vmax.xlane.f32.xlu0 %v928
    %v1004 = vpop.xlane.xlu0 %1003
    %1005 = vmax.xlane.f32.xlu0 %v933
    %v1006 = vpop.xlane.xlu0 %1005
    %1007 = vmax.xlane.f32.xlu0 %v938
    %v1008 = vpop.xlane.xlu0 %1007
    %1009 = vmax.xlane.f32.xlu0 %v943
    %v1010 = vpop.xlane.xlu0 %1009
    %1011 = vmax.xlane.f32.xlu0 %v948
    %v1012 = vpop.xlane.xlu0 %1011
    %1013 = vmax.xlane.f32.xlu0 %v953
    %v1014 = vpop.xlane.xlu0 %1013
    %1015 = vmax.xlane.f32.xlu0 %v958
    %v1016 = vpop.xlane.xlu0 %1015
    %1017 = vmax.xlane.f32.xlu0 %v963
    %v1018 = vpop.xlane.xlu0 %1017
    %1019 = vmax.xlane.f32.xlu0 %v968
    %v1020 = vpop.xlane.xlu0 %1019
    %1021 = vmax.xlane.f32.xlu0 %v973
    %v1022 = vpop.xlane.xlu0 %1021
    %1023 = vmax.xlane.f32.xlu0 %v978
    %v1024 = vpop.xlane.xlu0 %1023
    %1025 = vmax.xlane.f32.xlu0 %v983
    %v1026 = vpop.xlane.xlu0 %1025
    %1027 = vmax.xlane.f32.xlu0 %v988
    %v1028 = vpop.xlane.xlu0 %1027
    %1029 = vmax.xlane.f32.xlu0 %v993
    %v1030 = vpop.xlane.xlu0 %1029
    %1031 = vmax.xlane.f32.xlu0 %v998
    %v1032 = vpop.xlane.xlu0 %1031
    %v1033 = vsub.f32 %v923, %v1002
    %v1034 = vsub.f32 %v928, %v1004
    %v1035 = vsub.f32 %v933, %v1006
    %v1036 = vsub.f32 %v938, %v1008
    %v1037 = vsub.f32 %v943, %v1010
    %v1038 = vsub.f32 %v948, %v1012
    %v1039 = vsub.f32 %v953, %v1014
    %v1040 = vsub.f32 %v958, %v1016
    %v1041 = vsub.f32 %v963, %v1018
    %v1042 = vsub.f32 %v968, %v1020
    %v1043 = vsub.f32 %v973, %v1022
    %v1044 = vsub.f32 %v978, %v1024
    %v1045 = vsub.f32 %v983, %v1026
    %v1046 = vsub.f32 %v988, %v1028
    %v1047 = vsub.f32 %v993, %v1030
    %v1048 = vsub.f32 %v998, %v1032
    %v1049 = vmul.f32 %v1033, 1.442695
    %v1050 = vpow.pop %v1049
    %v1051 = vmul.f32 %v1034, 1.442695
    %v1052 = vpow.pop %v1051
    %v1053 = vmul.f32 %v1035, 1.442695
    %v1054 = vpow.pop %v1053
    %v1055 = vmul.f32 %v1036, 1.442695
    %v1056 = vpow.pop %v1055
    %v1057 = vmul.f32 %v1037, 1.442695
    %v1058 = vpow.pop %v1057
    %v1059 = vmul.f32 %v1038, 1.442695
    %v1060 = vpow.pop %v1059
    %v1061 = vmul.f32 %v1039, 1.442695
    %v1062 = vpow.pop %v1061
    %v1063 = vmul.f32 %v1040, 1.442695
    %v1064 = vpow.pop %v1063
    %v1065 = vmul.f32 %v1041, 1.442695
    %v1066 = vpow.pop %v1065
    %v1067 = vmul.f32 %v1042, 1.442695
    %v1068 = vpow.pop %v1067
    %v1069 = vmul.f32 %v1043, 1.442695
    %v1070 = vpow.pop %v1069
    %v1071 = vmul.f32 %v1044, 1.442695
    %v1072 = vpow.pop %v1071
    %v1073 = vmul.f32 %v1045, 1.442695
    %v1074 = vpow.pop %v1073
    %v1075 = vmul.f32 %v1046, 1.442695
    %v1076 = vpow.pop %v1075
    %v1077 = vmul.f32 %v1047, 1.442695
    %v1078 = vpow.pop %v1077
    %v1079 = vmul.f32 %v1048, 1.442695
    %v1080 = vpow.pop %v1079
    %1081 = vadd.xlane.f32.xlu0 %v1050
    %v1082 = vpop.xlane.xlu0 %1081
    %1083 = vadd.xlane.f32.xlu0 %v1052
    %v1084 = vpop.xlane.xlu0 %1083
    %1085 = vadd.xlane.f32.xlu0 %v1054
    %v1086 = vpop.xlane.xlu0 %1085
    %1087 = vadd.xlane.f32.xlu0 %v1056
    %v1088 = vpop.xlane.xlu0 %1087
    %1089 = vadd.xlane.f32.xlu0 %v1058
    %v1090 = vpop.xlane.xlu0 %1089
    %1091 = vadd.xlane.f32.xlu0 %v1060
    %v1092 = vpop.xlane.xlu0 %1091
    %1093 = vadd.xlane.f32.xlu0 %v1062
    %v1094 = vpop.xlane.xlu0 %1093
    %1095 = vadd.xlane.f32.xlu0 %v1064
    %v1096 = vpop.xlane.xlu0 %1095
    %1097 = vadd.xlane.f32.xlu0 %v1066
    %v1098 = vpop.xlane.xlu0 %1097
    %1099 = vadd.xlane.f32.xlu0 %v1068
    %v1100 = vpop.xlane.xlu0 %1099
    %1101 = vadd.xlane.f32.xlu0 %v1070
    %v1102 = vpop.xlane.xlu0 %1101
    %1103 = vadd.xlane.f32.xlu0 %v1072
    %v1104 = vpop.xlane.xlu0 %1103
    %1105 = vadd.xlane.f32.xlu0 %v1074
    %v1106 = vpop.xlane.xlu0 %1105
    %1107 = vadd.xlane.f32.xlu0 %v1076
    %v1108 = vpop.xlane.xlu0 %1107
    %1109 = vadd.xlane.f32.xlu0 %v1078
    %v1110 = vpop.xlane.xlu0 %1109
    %1111 = vadd.xlane.f32.xlu0 %v1080
    %v1112 = vpop.xlane.xlu0 %1111
    %v1113 = vrcp.pop %v1082
    %v1114 = vrcp.pop %v1084
    %v1115 = vrcp.pop %v1086
    %v1116 = vrcp.pop %v1088
    %v1117 = vrcp.pop %v1090
    %v1118 = vrcp.pop %v1092
    %v1119 = vrcp.pop %v1094
    %v1120 = vrcp.pop %v1096
    %v1121 = vrcp.pop %v1098
    %v1122 = vrcp.pop %v1100
    %v1123 = vrcp.pop %v1102
    %v1124 = vrcp.pop %v1104
    %v1125 = vrcp.pop %v1106
    %v1126 = vrcp.pop %v1108
    %v1127 = vrcp.pop %v1110
    %v1128 = vrcp.pop %v1112
    %v1129 = vmul.f32 %v1050, %v1113
    %v1130 = vmul.f32 %v1052, %v1114
    %v1131 = vmul.f32 %v1054, %v1115
    %v1132 = vmul.f32 %v1056, %v1116
    %v1133 = vmul.f32 %v1058, %v1117
    %v1134 = vmul.f32 %v1060, %v1118
    %v1135 = vmul.f32 %v1062, %v1119
    %v1136 = vmul.f32 %v1064, %v1120
    %v1137 = vmul.f32 %v1066, %v1121
    %v1138 = vmul.f32 %v1068, %v1122
    %v1139 = vmul.f32 %v1070, %v1123
    %v1140 = vmul.f32 %v1072, %v1124
    %v1141 = vmul.f32 %v1074, %v1125
    %v1142 = vmul.f32 %v1076, %v1126
    %v1143 = vmul.f32 %v1078, %v1127
    %v1144 = vmul.f32 %v1080, %v1128
    %v1145 = vadd.f32 %v1129, %v1130
    %v1146 = vadd.f32 %v1145, %v1131
    %v1147 = vadd.f32 %v1146, %v1132
    %v1148 = vadd.f32 %v1147, %v1133
    %v1149 = vadd.f32 %v1148, %v1134
    %v1150 = vadd.f32 %v1149, %v1135
    %v1151 = vadd.f32 %v1150, %v1136
    %v1152 = vadd.f32 %v1151, %v1137
    %v1153 = vadd.f32 %v1152, %v1138
    %v1154 = vadd.f32 %v1153, %v1139
    %v1155 = vadd.f32 %v1154, %v1140
    %v1156 = vadd.f32 %v1155, %v1141
    %v1157 = vadd.f32 %v1156, %v1142
    %v1158 = vadd.f32 %v1157, %v1143
    %v1159 = vadd.f32 %v1158, %v1144
    %v1160 = vrot.slane %v1159, 4
    %v1161 = vadd.f32 %v1159, %v1160
    %v1162 = vrot.slane %v1161, 2
    %v1163 = vadd.f32 %v1161, %v1162
    %v1164 = vrot.slane %v1163, 1
    %v1165 = vadd.f32 %v1163, %v1164
    %v1166 = vadd.f32 %v1165, 1e-09
    %v1167 = vrcp.pop %v1166
    %v1168 = vmul.f32 %v1129, %v1167
    %v1169 = vmul.f32 %v1130, %v1167
    %v1170 = vmul.f32 %v1131, %v1167
    %v1171 = vmul.f32 %v1132, %v1167
    %v1172 = vmul.f32 %v1133, %v1167
    %v1173 = vmul.f32 %v1134, %v1167
    %v1174 = vmul.f32 %v1135, %v1167
    %v1175 = vmul.f32 %v1136, %v1167
    %v1176 = vmul.f32 %v1137, %v1167
    %v1177 = vmul.f32 %v1138, %v1167
    %v1178 = vmul.f32 %v1139, %v1167
    %v1179 = vmul.f32 %v1140, %v1167
    %v1180 = vmul.f32 %v1141, %v1167
    %v1181 = vmul.f32 %v1142, %v1167
    %v1182 = vmul.f32 %v1143, %v1167
    %v1183 = vmul.f32 %v1144, %v1167
    %v1184 = vmul.f32 %v1165, %v1167
    %v1185 = vadd.f32 %v177, %v610
    %v1186 = vadd.f32 %v183, %v615
    %v1187 = vadd.f32 %v189, %v620
    %v1188 = vadd.f32 %v195, %v625
    %v1189 = vmul.f32 %v634, %v1184
    %v1190 = vmul.f32 %v639, %v1184
    %v1191 = vmul.f32 %v644, %v1184
    %v1192 = vmul.f32 %v649, %v1184
    %1193 = vmatprep.subr.mxu0 0.0
    %1194 = vmatpush1.msra.mxu0 %v1168
    %1195 = vmatprep.subr.mxu0 0.0
    %1196 = vmatpush1.msra.mxu0 %v1169
    %1197 = vmatprep.subr.mxu0 0.0
    %1198 = vmatpush1.msra.mxu0 %v1170
    %1199 = vmatprep.subr.mxu0 0.0
    %1200 = vmatpush1.msra.mxu0 %v1171
    %1201 = vmatprep.subr.mxu0 0.0
    %1202 = vmatpush1.msra.mxu0 %v1172
    %1203 = vmatprep.subr.mxu0 0.0
    %1204 = vmatpush1.msra.mxu0 %v1173
    %1205 = vmatprep.subr.mxu0 0.0
    %1206 = vmatpush1.msra.mxu0 %v1174
    %1207 = vmatprep.subr.mxu0 0.0
    %1208 = vmatpush1.msra.mxu0 %v1175
    %1209 = vmatprep.subr.mxu0 0.0
    %1210 = vmatpush1.msra.mxu0 %v1176
    %1211 = vmatprep.subr.mxu0 0.0
    %1212 = vmatpush1.msra.mxu0 %v1177
    %1213 = vmatprep.subr.mxu0 0.0
    %1214 = vmatpush1.msra.mxu0 %v1178
    %1215 = vmatprep.subr.mxu0 0.0
    %1216 = vmatpush1.msra.mxu0 %v1179
    %1217 = vmatprep.subr.mxu0 0.0
    %1218 = vmatpush1.msra.mxu0 %v1180
    %1219 = vmatprep.subr.mxu0 0.0
    %1220 = vmatpush1.msra.mxu0 %v1181
    %1221 = vmatprep.subr.mxu0 0.0
    %1222 = vmatpush1.msra.mxu0 %v1182
    %1223 = vmatprep.subr.mxu0 0.0
    %1224 = vmatpush1.msra.mxu0 %v1183
    %1225 = vmatprep.subr.mxu0 0.0
    %1226 = vmatpush1.msra.mxu0 0.0
    %1227 = vmatprep.subr.mxu0 0.0
    %1228 = vmatpush1.msra.mxu0 0.0
    %1229 = vmatprep.subr.mxu0 0.0
    %1230 = vmatpush1.msra.mxu0 0.0
    %1231 = vmatprep.subr.mxu0 0.0
    %1232 = vmatpush1.msra.mxu0 0.0
    %1233 = vmatprep.subr.mxu0 0.0
    %1234 = vmatpush1.msra.mxu0 0.0
    %1235 = vmatprep.subr.mxu0 0.0
    %1236 = vmatpush1.msra.mxu0 0.0
    %1237 = vmatprep.subr.mxu0 0.0
    %1238 = vmatpush1.msra.mxu0 0.0
    %1239 = vmatprep.subr.mxu0 0.0
    %1240 = vmatpush1.msra.mxu0 0.0
    %1241 = vmatprep.subr.mxu0 0.0
    %1242 = vmatpush1.msra.mxu0 0.0
    %1243 = vmatprep.subr.mxu0 0.0
    %1244 = vmatpush1.msra.mxu0 0.0
    %1245 = vmatprep.subr.mxu0 0.0
    %1246 = vmatpush1.msra.mxu0 0.0
    %1247 = vmatprep.subr.mxu0 0.0
    %1248 = vmatpush1.msra.mxu0 0.0
    %1249 = vmatprep.subr.mxu0 0.0
    %1250 = vmatpush1.msra.mxu0 0.0
    %1251 = vmatprep.subr.mxu0 0.0
    %1252 = vmatpush1.msra.mxu0 0.0
    %1253 = vmatprep.subr.mxu0 0.0
    %1254 = vmatpush1.msra.mxu0 0.0
    %1255 = vmatprep.subr.mxu0 0.0
    %1256 = vmatpush1.msra.mxu0 0.0
    %1257 = vmatprep.mubr.f32.mxu0 0.0
    %1258 = vmatmul.mubr.f32.gmra.mrb[0].mxu0 %v153
    %v1259 = vpop.f32.mrb[0].mxu0
    %v1260 = vadd.f32 %v1189, %v1259
    %v1261 = vpop.f32.mrb[0].mxu0
    %1262 = vmatprep.mubr.f32.mxu0 0.0
    %1263 = vmatmul.mubr.f32.gmra.mrb[0].mxu0 %v159
    %v1264 = vpop.f32.mrb[0].mxu0
    %v1265 = vadd.f32 %v1190, %v1264
    %v1266 = vpop.f32.mrb[0].mxu0
    %1267 = vmatprep.mubr.f32.mxu0 0.0
    %1268 = vmatmul.mubr.f32.gmra.mrb[0].mxu0 %v165
    %v1269 = vpop.f32.mrb[0].mxu0
    %v1270 = vadd.f32 %v1191, %v1269
    %v1271 = vpop.f32.mrb[0].mxu0
    %1272 = vmatprep.mubr.f32.mxu0 0.0
    %1273 = vmatmul.mubr.f32.gmra.mrb[0].mxu0 %v171
    %v1274 = vpop.f32.mrb[0].mxu0
    %v1275 = vadd.f32 %v1192, %v1274
    %v1276 = vpop.f32.mrb[0].mxu0
    %1277 = vdwg.mxu0
    %v1278 = vsub.f32 %v1185, %v1260
    %v1279 = vsub.f32 %v1186, %v1265
    %v1280 = vsub.f32 %v1187, %v1270
    %v1281 = vsub.f32 %v1188, %v1275
    %s1282 = scalar_lea.vmem [#allocation2], 32
    %1283 = vst [vmem:[%s1282] sm:$0xff] %v1278
    %1284 = vst [vmem:[%s1282 + $0x8] sm:$0xff] %v1279
    %1285 = vst [vmem:[%s1282 + $0x10] sm:$0xff] %v1280
    %1286 = vst [vmem:[%s1282 + $0x18] sm:$0xff] %v1281
    %1287 = vadd.xlane.f32.xlu0 %v1278
    %v1288 = vpop.xlane.xlu0 %1287
    %1289 = vadd.xlane.f32.xlu0 %v1279
    %v1290 = vpop.xlane.xlu0 %1289
    %1291 = vadd.xlane.f32.xlu0 %v1280
    %v1292 = vpop.xlane.xlu0 %1291
    %1293 = vadd.xlane.f32.xlu0 %v1281
    %v1294 = vpop.xlane.xlu0 %1293
    %v1295 = vadd.f32 %v756, %v1288
    %v1296 = vadd.f32 %v757, %v1290
    %v1297 = vadd.f32 %v758, %v1292
    %v1298 = vadd.f32 %v759, %v1294
    %v1299 = vmul.f32 %v1278, %v1278
    %v1300 = vmul.f32 %v1279, %v1279
    %v1301 = vmul.f32 %v1280, %v1280
    %v1302 = vmul.f32 %v1281, %v1281
    %1303 = vadd.xlane.f32.xlu0 %v1299
    %v1304 = vpop.xlane.xlu0 %1303
    %1305 = vadd.xlane.f32.xlu0 %v1300
    %v1306 = vpop.xlane.xlu0 %1305
    %1307 = vadd.xlane.f32.xlu0 %v1301
    %v1308 = vpop.xlane.xlu0 %1307
    %1309 = vadd.xlane.f32.xlu0 %v1302
    %v1310 = vpop.xlane.xlu0 %1309
    %v1311 = vadd.f32 %v772, %v1304
    %v1312 = vadd.f32 %v773, %v1306
    %v1313 = vadd.f32 %v774, %v1308
    %v1314 = vadd.f32 %v775, %v1310
    %v1315 = vmul.f32 %v1295, 0.00390625
    %v1316 = vmul.f32 %v1296, 0.00390625
    %v1317 = vmul.f32 %v1297, 0.00390625
    %v1318 = vmul.f32 %v1298, 0.00390625
    %v1319 = vmul.f32 %v1311, 0.00390625
    %v1320 = vmul.f32 %v1312, 0.00390625
    %v1321 = vmul.f32 %v1313, 0.00390625
    %v1322 = vmul.f32 %v1314, 0.00390625
    %v1323 = vmul.f32 %v1315, %v1315
    %v1324 = vmul.f32 %v1316, %v1316
    %v1325 = vmul.f32 %v1317, %v1317
    %v1326 = vmul.f32 %v1318, %v1318
    %v1327 = vsub.f32 %v1319, %v1323
    %v1328 = vsub.f32 %v1320, %v1324
    %v1329 = vsub.f32 %v1321, %v1325
    %v1330 = vsub.f32 %v1322, %v1326
    %v1331 = vld [vmem:[%s4] sm:$0xff]
    %v1332 = vld [vmem:[%s4 + $0x8] sm:$0xff]
    %v1333 = vld [vmem:[%s4 + $0x10] sm:$0xff]
    %v1334 = vld [vmem:[%s4 + $0x18] sm:$0xff]
    %v1335 = vld [vmem:[%s5] sm:$0xff]
    %v1336 = vld [vmem:[%s5 + $0x8] sm:$0xff]
    %v1337 = vld [vmem:[%s5 + $0x10] sm:$0xff]
    %v1338 = vld [vmem:[%s5 + $0x18] sm:$0xff]
    %v1339 = vadd.f32 %v1327, 1e-05
    %v1340 = vadd.f32 %v1328, 1e-05
    %v1341 = vadd.f32 %v1329, 1e-05
    %v1342 = vadd.f32 %v1330, 1e-05
    %v1343 = vrsqrt.pop %v1339
    %v1344 = vrsqrt.pop %v1340
    %v1345 = vrsqrt.pop %v1341
    %v1346 = vrsqrt.pop %v1342
    %v1347 = vmul.f32 %v1331, %v1343
    %v1348 = vmul.f32 %v1332, %v1344
    %v1349 = vmul.f32 %v1333, %v1345
    %v1350 = vmul.f32 %v1334, %v1346
    %v1351 = vmul.f32 %v1315, %v1347
    %v1352 = vmul.f32 %v1316, %v1348
    %v1353 = vmul.f32 %v1317, %v1349
    %v1354 = vmul.f32 %v1318, %v1350
    %v1355 = vsub.f32 %v1335, %v1351
    %v1356 = vsub.f32 %v1336, %v1352
    %v1357 = vsub.f32 %v1337, %v1353
    %v1358 = vsub.f32 %v1338, %v1354
    %v1359 = vld [vmem:[#allocation2] sm:$0xff]
    %v1360 = vld [vmem:[#allocation2 + $0x8] sm:$0xff]
    %v1361 = vld [vmem:[#allocation2 + $0x10] sm:$0xff]
    %v1362 = vld [vmem:[#allocation2 + $0x18] sm:$0xff]
    %v1363 = vld [vmem:[#allocation2 + $0x20] sm:$0xff]
    %v1364 = vld [vmem:[#allocation2 + $0x28] sm:$0xff]
    %v1365 = vld [vmem:[#allocation2 + $0x30] sm:$0xff]
    %v1366 = vld [vmem:[#allocation2 + $0x38] sm:$0xff]
    %1368 = vset.pattern.permute.xlu0 0
    %1369 = vperm.xlu0 %1368, %v1347
    %v1370 = vpop.permute.xlu0 %1369
    %1373 = vset.pattern.permute.xlu0 0
    %1374 = vperm.xlu0 %1373, %v1348
    %v1375 = vpop.permute.xlu0 %1374
    %1378 = vset.pattern.permute.xlu0 0
    %1379 = vperm.xlu0 %1378, %v1349
    %v1380 = vpop.permute.xlu0 %1379
    %1383 = vset.pattern.permute.xlu0 0
    %1384 = vperm.xlu0 %1383, %v1350
    %v1385 = vpop.permute.xlu0 %1384
    %v1387 = vmul.f32 %v1359, %v1370
    %v1388 = vmul.f32 %v1360, %v1375
    %v1389 = vmul.f32 %v1361, %v1380
    %v1390 = vmul.f32 %v1362, %v1385
    %v1391 = vmul.f32 %v1363, %v1370
    %v1392 = vmul.f32 %v1364, %v1375
    %v1393 = vmul.f32 %v1365, %v1380
    %v1394 = vmul.f32 %v1366, %v1385
    %1396 = vset.pattern.permute.xlu0 0
    %1397 = vperm.xlu0 %1396, %v1355
    %v1398 = vpop.permute.xlu0 %1397
    %1401 = vset.pattern.permute.xlu0 0
    %1402 = vperm.xlu0 %1401, %v1356
    %v1403 = vpop.permute.xlu0 %1402
    %1406 = vset.pattern.permute.xlu0 0
    %1407 = vperm.xlu0 %1406, %v1357
    %v1408 = vpop.permute.xlu0 %1407
    %1411 = vset.pattern.permute.xlu0 0
    %1412 = vperm.xlu0 %1411, %v1358
    %v1413 = vpop.permute.xlu0 %1412
    %v1415 = vadd.f32 %v1387, %v1398
    %v1416 = vadd.f32 %v1388, %v1403
    %v1417 = vadd.f32 %v1389, %v1408
    %v1418 = vadd.f32 %v1390, %v1413
    %v1419 = vadd.f32 %v1391, %v1398
    %v1420 = vadd.f32 %v1392, %v1403
    %v1421 = vadd.f32 %v1393, %v1408
    %v1422 = vadd.f32 %v1394, %v1413
    %v1423 = vld [vmem:[%s0] sm:$0xff]
    %v1424 = vld [vmem:[%s0 + $0x8] sm:$0xff]
    %v1425 = vld [vmem:[%s0 + $0x10] sm:$0xff]
    %v1426 = vld [vmem:[%s0 + $0x18] sm:$0xff]
    %v1427 = vld [vmem:[%s0 + $0x20] sm:$0xff]
    %v1428 = vld [vmem:[%s0 + $0x28] sm:$0xff]
    %v1429 = vld [vmem:[%s0 + $0x30] sm:$0xff]
    %v1430 = vld [vmem:[%s0 + $0x38] sm:$0xff]
    %v1431 = vmax.f32 %v1415, 0.0
    %v1432 = vmax.f32 %v1416, 0.0
    %v1433 = vmax.f32 %v1417, 0.0
    %v1434 = vmax.f32 %v1418, 0.0
    %v1435 = vmax.f32 %v1419, 0.0
    %v1436 = vmax.f32 %v1420, 0.0
    %v1437 = vmax.f32 %v1421, 0.0
    %v1438 = vmax.f32 %v1422, 0.0
    %v1439 = vadd.f32 %v1423, %v1431
    %v1440 = vadd.f32 %v1424, %v1432
    %v1441 = vadd.f32 %v1425, %v1433
    %v1442 = vadd.f32 %v1426, %v1434
    %v1443 = vadd.f32 %v1427, %v1435
    %v1444 = vadd.f32 %v1428, %v1436
    %v1445 = vadd.f32 %v1429, %v1437
    %v1446 = vadd.f32 %v1430, %v1438
    %1447 = vst [vmem:[#allocation3] sm:$0xff] %v1439
    %1448 = vst [vmem:[#allocation3 + $0x8] sm:$0xff] %v1440
    %1449 = vst [vmem:[#allocation3 + $0x10] sm:$0xff] %v1441
    %1450 = vst [vmem:[#allocation3 + $0x18] sm:$0xff] %v1442
    %1451 = vst [vmem:[#allocation3 + $0x20] sm:$0xff] %v1443
    %1452 = vst [vmem:[#allocation3 + $0x28] sm:$0xff] %v1444
    %1453 = vst [vmem:[#allocation3 + $0x30] sm:$0xff] %v1445
    %1454 = vst [vmem:[#allocation3 + $0x38] sm:$0xff] %v1446
    // Predicated region
    $region26: #{tpu_custom_call.1} parent=1 // pred_check
      _
    $region27: #{tpu_custom_call.1} parent=1 // pred_check_branch
      %1456 = sbr.rel (0) target = $region29
    $region28: #{tpu_custom_call.1} parent=1 // pred_region
      %s1458 = ssub.s32 1024, 1024
      %1459 = vsyncadd [#allocation4], %s1458
      %s1460 = sshll.u32 [#allocation3], 4
      %s1461 = int_to_ptr.vmem [resolvable:$true] %s1460
      %1466 = dma.vmem_to_hbm [thread:$0]  %s1461, 1024, %s6, [#allocation4], 128, 128, 8
    $region29: #{tpu_custom_call.1} parent=1 // pred_fallthru
      _
    // Predicated region
    $region30: #{tpu_custom_call.1} parent=1 // pred_check
      _
    $region31: #{tpu_custom_call.1} parent=1 // pred_check_branch
      %1468 = sbr.rel (0) target = $region33
    $region32: #{tpu_custom_call.1} parent=1 // pred_region
      %1469 = dma.done [#allocation4], 1024
    $region33: #{tpu_custom_call.1} parent=1 // pred_fallthru
      _
    %1470 = vsyncpa [#allocation4], 1

</llo_original>
